<compile_context>
chip_gen: v5e
topology: v5e:2x2
jax: 0.10.0
libtpu: 0.0.40
codegen_flags: <defaults>
</compile_context>

<pallas_src>
import jax
import jax.numpy as jnp
from jax.experimental import pallas as pl
from jax.experimental.pallas import tpu as pltpu


def _boosted_dnn_kernel(x_ref, w1_ref, t1_ref, w2_ref, t2_ref, w3_ref, b3_ref,
                        out_ref):
    """relu(x@w1+t1) -> relu(.@w2+t2) -> .@w3+b3 -> grouped log-softmax."""
    # Layer 1: f32 x, f32 w1 (tiny), BN folded into (w1, t1), then ReLU.
    h1 = jnp.dot(x_ref[...], w1_ref[...], preferred_element_type=jnp.float32)
    h1 = jnp.maximum(h1 + t1_ref[...], 0.0)

    # Layer 2: bf16 MXU operands, f32 accumulate.  BN folded into (w2, t2).
    h2 = jnp.dot(h1.astype(jnp.bfloat16), w2_ref[...],
                 preferred_element_type=jnp.float32)
    h2 = jnp.maximum(h2 + t2_ref[...], 0.0)

    # Layer 3: logits in class-major padded layout (column index = c*Wp + t).
    z = jnp.dot(h2.astype(jnp.bfloat16), w3_ref[...],
                preferred_element_type=jnp.float32) + b3_ref[...]

    # Fused, numerically-stable log-softmax over the 4 classes of each window
    # position.  Classes of window t live at lanes {t, Wp+t, 2Wp+t, 3Wp+t},
    # i.e. four contiguous width-Wp slabs -> static lane slices only.
    wp = z.shape[-1] // 4
    z0 = z[:, 0 * wp:1 * wp]
    z1 = z[:, 1 * wp:2 * wp]
    z2 = z[:, 2 * wp:3 * wp]
    z3 = z[:, 3 * wp:4 * wp]
    m = jnp.maximum(jnp.maximum(z0, z1), jnp.maximum(z2, z3))
    denom = (jnp.exp(z0 - m) + jnp.exp(z1 - m)
             + jnp.exp(z2 - m) + jnp.exp(z3 - m))
    lse = m + jnp.log(denom)
    lse4 = jnp.concatenate([lse, lse, lse, lse], axis=-1)
    # Single lane-dense (tb, 4*Wp) store (4*Wp is a multiple of 128).
    out_ref[...] = z - lse4


def prepare_params(params, window_size, eps=1e-5, lane=128):
    """One-time static weight prep: BN fold, bf16 cast, class-major padding."""
    (w1, b1, g1, be1, m1, v1,
     w2, b2, g2, be2, m2, v2,
     w3, b3) = params

    # Fold BatchNorm1d running stats into the preceding Linear:
    #   ((x@w + b) - m) / sqrt(v+eps) * g + be  ==  x@(w*s) + ((b-m)*s + be)
    s1 = g1 * jax.lax.rsqrt(v1 + eps)
    s2 = g2 * jax.lax.rsqrt(v2 + eps)
    w1f = (w1 * s1[None, :]).astype(jnp.float32)        # keep f32 (tiny)
    t1f = ((b1 - m1) * s1 + be1).astype(jnp.float32)
    w2f = (w2 * s2[None, :]).astype(jnp.bfloat16)
    t2f = ((b2 - m2) * s2 + be2).astype(jnp.float32)

    # Last layer: permute columns (t*4 + c) -> (c*Wp + t) and zero-pad the
    # window axis to Wp (multiple of 32) so 4*Wp is a multiple of 128 lanes.
    h2dim, dout = w3.shape
    W = window_size
    assert dout == 4 * W, "context_window_size must equal window_size"
    Wp = ((W + lane // 4 - 1) // (lane // 4)) * (lane // 4)
    w3cm = jnp.transpose(w3.reshape(h2dim, W, 4), (0, 2, 1))        # (h2,4,W)
    w3p = jnp.pad(w3cm, ((0, 0), (0, 0), (0, Wp - W))).reshape(h2dim, 4 * Wp)
    b3cm = jnp.transpose(b3.reshape(W, 4), (1, 0))                  # (4, W)
    b3p = jnp.pad(b3cm, ((0, 0), (0, Wp - W))).reshape(4 * Wp)

    return (w1f, t1f, w2f, t2f,
            w3p.astype(jnp.bfloat16), b3p.astype(jnp.float32), Wp)


def boosted_dnn_forward(features, folded_params, *, batch_tile=8):
    """features: (B, W, F) f32; folded_params from prepare_params()."""
    w1f, t1f, w2f, t2f, w3p, b3p, Wp = folded_params
    B, W, F = features.shape
    fin = W * F
    h1dim = w1f.shape[1]
    h2dim = w2f.shape[1]
    dpad = w3p.shape[1]                       # 4 * Wp, multiple of 128

    tb = batch_tile
    Bp = ((B + tb - 1) // tb) * tb            # batch padded to tile multiple
    n_tiles = Bp // tb

    # Row-major flatten == torch .view(B, -1); metadata-only, stays f32
    # (no wrapper-side convert/copy launch).
    x = features.reshape(B, fin)
    if Bp != B:
        x = jnp.pad(x, ((0, Bp - B), (0, 0)))

    def row(v):                                # (H,) -> (1, H) for the kernel
        return v.reshape(1, -1)

    def const2d(shape):                        # weight/bias: resident in VMEM,
        return pl.BlockSpec(shape, lambda b: (0, 0))   # fetched once per core

    def batched2d(shape):                      # activation/output batch tiles
        return pl.BlockSpec(shape, lambda b: (b, 0))

    flops = 2 * Bp * (fin * h1dim + h1dim * h2dim + h2dim * dpad)
    transcendentals = Bp * 5 * Wp              # 4 exps + 1 log per window slot
    bytes_accessed = (x.size * 4
                      + w1f.size * 4 + (w2f.size + w3p.size) * 2
                      + (t1f.size + t2f.size + b3p.size) * 4
                      + Bp * dpad * 4)

    log_probs = pl.pallas_call(
        _boosted_dnn_kernel,
        out_shape=jax.ShapeDtypeStruct((Bp, dpad), jnp.float32),
        grid=(n_tiles,),
        in_specs=[
            batched2d((tb, fin)),
            const2d((fin, h1dim)), const2d((1, h1dim)),
            const2d((h1dim, h2dim)), const2d((1, h2dim)),
            const2d((h2dim, dpad)), const2d((1, dpad)),
        ],
        out_specs=batched2d((tb, dpad)),
        compiler_params=pltpu.CompilerParams(
            # batch tiles are independent -> megacore split on v7x
            dimension_semantics=("parallel",)),
        cost_estimate=pl.CostEstimate(
            flops=flops,
            transcendentals=transcendentals,
            bytes_accessed=bytes_accessed),
    )(x, w1f, row(t1f), w2f, row(t2f), w3p, row(b3p))

    # Undo class-major padded layout: (Bp,4*Wp) -> (B,4,Wp) -> (B, W, 4).
    lp = log_probs[:B].reshape(B, 4, Wp)[:, :, :W]
    return jnp.transpose(lp, (0, 2, 1))


if __name__ == "__main__":
    # Small shapes consistent with the module:
    #   window_feature_size = W * F, context_window_size = W.
    # B=16 with batch_tile=8 exercises the batched "parallel" grid (2 tiles).
    B, W, F = 16, 8, 4
    H1, H2 = 512, 512
    fin, dout = W * F, W * 4

    key = jax.random.PRNGKey(0)
    ks = jax.random.split(key, 16)

    w1 = jax.random.normal(ks[0], (fin, H1), jnp.float32) * 0.05
    b1 = jax.random.normal(ks[1], (H1,), jnp.float32) * 0.05
    g1 = 1.0 + 0.1 * jax.random.normal(ks[2], (H1,), jnp.float32)
    be1 = 0.1 * jax.random.normal(ks[3], (H1,), jnp.float32)
    m1 = 0.1 * jax.random.normal(ks[4], (H1,), jnp.float32)
    v1 = 1.0 + 0.1 * jnp.abs(jax.random.normal(ks[5], (H1,), jnp.float32))

    w2 = jax.random.normal(ks[6], (H1, H2), jnp.float32) * 0.05
    b2 = jax.random.normal(ks[7], (H2,), jnp.float32) * 0.05
    g2 = 1.0 + 0.1 * jax.random.normal(ks[8], (H2,), jnp.float32)
    be2 = 0.1 * jax.random.normal(ks[9], (H2,), jnp.float32)
    m2 = 0.1 * jax.random.normal(ks[10], (H2,), jnp.float32)
    v2 = 1.0 + 0.1 * jnp.abs(jax.random.normal(ks[11], (H2,), jnp.float32))

    w3 = jax.random.normal(ks[12], (H2, dout), jnp.float32) * 0.05
    b3 = jax.random.normal(ks[13], (dout,), jnp.float32) * 0.05

    features = jax.random.normal(ks[14], (B, W, F), jnp.float32)

    params = (w1, b1, g1, be1, m1, v1, w2, b2, g2, be2, m2, v2, w3, b3)
    folded = prepare_params(params, W)

    out = boosted_dnn_forward(features, folded)
    out = jax.block_until_ready(out)
    assert out.shape == (B, W, 4)

    # Pure-JAX f32 reference (eval-mode semantics) for sanity.
    eps = 1e-5
    xr = features.reshape(B, fin)
    h1r = jnp.maximum(((xr @ w1 + b1) - m1) / jnp.sqrt(v1 + eps) * g1 + be1, 0.0)
    h2r = jnp.maximum(((h1r @ w2 + b2) - m2) / jnp.sqrt(v2 + eps) * g2 + be2, 0.0)
    zr = (h2r @ w3 + b3).reshape(B, W, 4)
    ref = jax.nn.log_softmax(zr, axis=2)
    # Tolerance covers bf16 MXU-operand quantization of h1/w2 and h2/w3
    # (x/w1 and all accumulation stay f32).
    assert jnp.allclose(out, ref, atol=2e-2, rtol=2e-2), (
        float(jnp.max(jnp.abs(out - ref))))

    print("KERNEL_OK")
</pallas_src>

<mosaic_0001>
module attributes {stable_mosaic.version = 11 : i64} {
  func.func @_boosted_dnn_kernel(%arg0: i32, %arg1: memref<8x32xf32, #tpu.memory_space<vmem>>, %arg2: memref<32x512xf32, #tpu.memory_space<vmem>>, %arg3: memref<1x512xf32, #tpu.memory_space<vmem>>, %arg4: memref<512x512xbf16, #tpu.memory_space<vmem>>, %arg5: memref<1x512xf32, #tpu.memory_space<vmem>>, %arg6: memref<512x128xbf16, #tpu.memory_space<vmem>>, %arg7: memref<1x128xf32, #tpu.memory_space<vmem>>, %arg8: memref<8x128xf32, #tpu.memory_space<vmem>>) attributes {dimension_semantics = [#tpu.dimension_semantics<parallel>], iteration_bounds = array<i64: 2>, scalar_prefetch = 0 : i64, scratch_operands = 0 : i64, tpu.core_type = #tpu.core_type<tc>, window_params = [{transform_indices = @transform_0, window_bounds = array<i64: 8, 32>}, {pipeline_mode = #tpu.pipeline_mode<synchronous>, transform_indices = @transform_1, window_bounds = array<i64: 32, 512>}, {pipeline_mode = #tpu.pipeline_mode<synchronous>, transform_indices = @transform_2, window_bounds = array<i64: 1, 512>}, {pipeline_mode = #tpu.pipeline_mode<synchronous>, transform_indices = @transform_3, window_bounds = array<i64: 512, 512>}, {pipeline_mode = #tpu.pipeline_mode<synchronous>, transform_indices = @transform_4, window_bounds = array<i64: 1, 512>}, {pipeline_mode = #tpu.pipeline_mode<synchronous>, transform_indices = @transform_5, window_bounds = array<i64: 512, 128>}, {pipeline_mode = #tpu.pipeline_mode<synchronous>, transform_indices = @transform_6, window_bounds = array<i64: 1, 128>}, {transform_indices = @transform_7, window_bounds = array<i64: 8, 128>}]} {
    %c0 = arith.constant 0 : index
    %c0_0 = arith.constant 0 : index
    %0 = vector.load %arg1[%c0, %c0_0] : memref<8x32xf32, #tpu.memory_space<vmem>>, vector<8x32xf32>
    %c0_1 = arith.constant 0 : index
    %c0_2 = arith.constant 0 : index
    %1 = vector.load %arg2[%c0_1, %c0_2] : memref<32x512xf32, #tpu.memory_space<vmem>>, vector<32x512xf32>
    %cst = arith.constant dense<0.000000e+00> : vector<8x512xf32>
    %2 = tpu.matmul %0, %1, %cst {dimension_numbers = #tpu.dot_dimension_numbers<[1], [0], [0], [1], [0, 0, 1, 1], [], []>} : vector<8x32xf32>, vector<32x512xf32>, vector<8x512xf32> -> vector<8x512xf32>
    %c0_3 = arith.constant 0 : index
    %c0_4 = arith.constant 0 : index
    %3 = vector.load %arg3[%c0_3, %c0_4] : memref<1x512xf32, #tpu.memory_space<vmem>>, vector<1x512xf32>
    %4 = vector.broadcast %3 : vector<1x512xf32> to vector<8x512xf32>
    %5 = arith.addf %2, %4 : vector<8x512xf32>
    %cst_5 = arith.constant 0.000000e+00 : f32
    %6 = vector.broadcast %cst_5 : f32 to vector<8x512xf32>
    %7 = arith.maximumf %5, %6 : vector<8x512xf32>
    %8 = arith.truncf %7 : vector<8x512xf32> to vector<8x512xbf16>
    %c0_6 = arith.constant 0 : index
    %c0_7 = arith.constant 0 : index
    %9 = vector.load %arg4[%c0_6, %c0_7] : memref<512x512xbf16, #tpu.memory_space<vmem>>, vector<512x512xbf16>
    %cst_8 = arith.constant dense<0.000000e+00> : vector<8x512xf32>
    %10 = tpu.matmul %8, %9, %cst_8 {dimension_numbers = #tpu.dot_dimension_numbers<[1], [0], [0], [1], [0, 0, 1, 1], [], []>} : vector<8x512xbf16>, vector<512x512xbf16>, vector<8x512xf32> -> vector<8x512xf32>
    %c0_9 = arith.constant 0 : index
    %c0_10 = arith.constant 0 : index
    %11 = vector.load %arg5[%c0_9, %c0_10] : memref<1x512xf32, #tpu.memory_space<vmem>>, vector<1x512xf32>
    %12 = vector.broadcast %11 : vector<1x512xf32> to vector<8x512xf32>
    %13 = arith.addf %10, %12 : vector<8x512xf32>
    %cst_11 = arith.constant 0.000000e+00 : f32
    %14 = vector.broadcast %cst_11 : f32 to vector<8x512xf32>
    %15 = arith.maximumf %13, %14 : vector<8x512xf32>
    %16 = arith.truncf %15 : vector<8x512xf32> to vector<8x512xbf16>
    %c0_12 = arith.constant 0 : index
    %c0_13 = arith.constant 0 : index
    %17 = vector.load %arg6[%c0_12, %c0_13] : memref<512x128xbf16, #tpu.memory_space<vmem>>, vector<512x128xbf16>
    %cst_14 = arith.constant dense<0.000000e+00> : vector<8x128xf32>
    %18 = tpu.matmul %16, %17, %cst_14 {dimension_numbers = #tpu.dot_dimension_numbers<[1], [0], [0], [1], [0, 0, 1, 1], [], []>} : vector<8x512xbf16>, vector<512x128xbf16>, vector<8x128xf32> -> vector<8x128xf32>
    %c0_15 = arith.constant 0 : index
    %c0_16 = arith.constant 0 : index
    %19 = vector.load %arg7[%c0_15, %c0_16] : memref<1x128xf32, #tpu.memory_space<vmem>>, vector<1x128xf32>
    %20 = vector.broadcast %19 : vector<1x128xf32> to vector<8x128xf32>
    %21 = arith.addf %18, %20 : vector<8x128xf32>
    %22 = vector.extract_strided_slice %21 {offsets = [0, 0], sizes = [8, 32], strides = [1, 1]} : vector<8x128xf32> to vector<8x32xf32>
    %23 = vector.extract_strided_slice %21 {offsets = [0, 32], sizes = [8, 32], strides = [1, 1]} : vector<8x128xf32> to vector<8x32xf32>
    %24 = vector.extract_strided_slice %21 {offsets = [0, 64], sizes = [8, 32], strides = [1, 1]} : vector<8x128xf32> to vector<8x32xf32>
    %25 = vector.extract_strided_slice %21 {offsets = [0, 96], sizes = [8, 32], strides = [1, 1]} : vector<8x128xf32> to vector<8x32xf32>
    %26 = arith.maximumf %22, %23 : vector<8x32xf32>
    %27 = arith.maximumf %24, %25 : vector<8x32xf32>
    %28 = arith.maximumf %26, %27 : vector<8x32xf32>
    %29 = arith.subf %22, %28 : vector<8x32xf32>
    %30 = math.exp %29 : vector<8x32xf32>
    %31 = arith.subf %23, %28 : vector<8x32xf32>
    %32 = math.exp %31 : vector<8x32xf32>
    %33 = arith.addf %30, %32 : vector<8x32xf32>
    %34 = arith.subf %24, %28 : vector<8x32xf32>
    %35 = math.exp %34 : vector<8x32xf32>
    %36 = arith.addf %33, %35 : vector<8x32xf32>
    %37 = arith.subf %25, %28 : vector<8x32xf32>
    %38 = math.exp %37 : vector<8x32xf32>
    %39 = arith.addf %36, %38 : vector<8x32xf32>
    %40 = math.log %39 : vector<8x32xf32>
    %41 = arith.addf %28, %40 : vector<8x32xf32>
    %42 = tpu.concatenate %41, %41, %41, %41 in 1 : vector<8x32xf32>, vector<8x32xf32>, vector<8x32xf32>, vector<8x32xf32> -> vector<8x128xf32>
    %43 = arith.subf %21, %42 : vector<8x128xf32>
    %c0_17 = arith.constant 0 : index
    %c0_18 = arith.constant 0 : index
    %44 = vector.load %arg8[%c0_17, %c0_18] : memref<8x128xf32, #tpu.memory_space<vmem>>, vector<8x128xf32>
    tpu.vector_store %arg8[%c0_17, %c0_18], %43 {strides = array<i32>} : memref<8x128xf32, #tpu.memory_space<vmem>>, vector<8x128xf32>,
    return
  }
  func.func @transform_0(%arg0: i32) -> (i32, i32) {
    %c0_i32 = arith.constant 0 : i32
    %c0_i32_0 = arith.constant 0 : i32
    return %arg0, %c0_i32 : i32, i32
  }
  func.func @transform_1(%arg0: i32) -> (i32, i32) {
    %c0_i32 = arith.constant 0 : i32
    %c0_i32_0 = arith.constant 0 : i32
    %c0_i32_1 = arith.constant 0 : i32
    return %c0_i32, %c0_i32_0 : i32, i32
  }
  func.func @transform_2(%arg0: i32) -> (i32, i32) {
    %c0_i32 = arith.constant 0 : i32
    %c0_i32_0 = arith.constant 0 : i32
    %c0_i32_1 = arith.constant 0 : i32
    return %c0_i32, %c0_i32_0 : i32, i32
  }
  func.func @transform_3(%arg0: i32) -> (i32, i32) {
    %c0_i32 = arith.constant 0 : i32
    %c0_i32_0 = arith.constant 0 : i32
    %c0_i32_1 = arith.constant 0 : i32
    return %c0_i32, %c0_i32_0 : i32, i32
  }
  func.func @transform_4(%arg0: i32) -> (i32, i32) {
    %c0_i32 = arith.constant 0 : i32
    %c0_i32_0 = arith.constant 0 : i32
    %c0_i32_1 = arith.constant 0 : i32
    return %c0_i32, %c0_i32_0 : i32, i32
  }
  func.func @transform_5(%arg0: i32) -> (i32, i32) {
    %c0_i32 = arith.constant 0 : i32
    %c0_i32_0 = arith.constant 0 : i32
    %c0_i32_1 = arith.constant 0 : i32
    return %c0_i32, %c0_i32_0 : i32, i32
  }
  func.func @transform_6(%arg0: i32) -> (i32, i32) {
    %c0_i32 = arith.constant 0 : i32
    %c0_i32_0 = arith.constant 0 : i32
    %c0_i32_1 = arith.constant 0 : i32
    return %c0_i32, %c0_i32_0 : i32, i32
  }
  func.func @transform_7(%arg0: i32) -> (i32, i32) {
    %c0_i32 = arith.constant 0 : i32
    %c0_i32_0 = arith.constant 0 : i32
    return %arg0, %c0_i32 : i32, i32
  }
}

</mosaic_0001>

<llo_original>
// kernel: tpu_custom_call.1
$region0: #{tpu_custom_call.1}
  #allocation0 [shape = 'u32[]', space=smem, size = 0x4, offset = 0x4, fixed_abs, tag = 'smem constant byte address 0x4 - core index']
  #allocation1 [shape = 'u32[72,128]{1,0:T(1,128)}', space=vmem, size = 0x9000, scoped, tag = 'internal scratch']
  %s0 = inlined_call_operand.hbm [shape: f32[16,32], index: 0, kind: input, shape index: {}]
  %s1 = inlined_call_operand.hbm [shape: f32[32,512], index: 1, kind: input, shape index: {}]
  %s2 = inlined_call_operand.hbm [shape: f32[1,512], index: 2, kind: input, shape index: {}]
  %s3 = inlined_call_operand.hbm [shape: bf16[512,512], index: 3, kind: input, shape index: {}]
  %s4 = inlined_call_operand.hbm [shape: f32[1,512], index: 4, kind: input, shape index: {}]
  %s5 = inlined_call_operand.hbm [shape: bf16[512,128], index: 5, kind: input, shape index: {}]
  %s6 = inlined_call_operand.vmem [shape: f32[1,128], index: 6, kind: input, shape index: {}]
  %s7 = inlined_call_operand.hbm [shape: f32[16,128], index: 7, kind: output, shape index: {}]
  %s8 = sld [smem:[#allocation0]]
  $region85: #{tpu_custom_call.1} parent=0
    _
  %s10 = ssub.s32 1, %s8
  %s11 = scalar_select 0, %s10, %s8
  $region1: #{tpu_custom_call.1} parent=0
    #allocation2 [shape = 'u8[8192]{0}', space=vmem, size = 0x2000, scoped, tag = 'input window, operand 0']
    #allocation3 [shape = 's32[2]{0}', space=sflag, size = 0x8, scoped, tag = 'scoped memory for tpu_custom_call.1']
    #allocation4 [shape = 's32[2]{0}', space=sflag, size = 0x8, scoped, tag = 'scoped memory for tpu_custom_call.1']
    #allocation5 [shape = 'u8[65536]{0}', space=vmem, size = 0x10000, scoped, tag = 'input window, operand 1, single buffered']
    #allocation6 [shape = 's32[1]{0}', space=sflag, size = 0x4, scoped, tag = 'scoped memory for tpu_custom_call.1']
    #allocation7 [shape = 'u8[2048]{0}', space=vmem, size = 0x800, scoped, tag = 'input window, operand 2, single buffered']
    #allocation8 [shape = 'u8[524288]{0}', space=vmem, size = 0x80000, scoped, tag = 'input window, operand 3, single buffered']
    #allocation9 [shape = 's32[1]{0}', space=sflag, size = 0x4, scoped, tag = 'scoped memory for tpu_custom_call.1']
    #allocation10 [shape = 'u8[2048]{0}', space=vmem, size = 0x800, scoped, tag = 'input window, operand 4, single buffered']
    #allocation11 [shape = 'u8[131072]{0}', space=vmem, size = 0x20000, scoped, tag = 'input window, operand 5, single buffered']
    #allocation12 [shape = 's32[1]{0}', space=sflag, size = 0x4, scoped, tag = 'scoped memory for tpu_custom_call.1']
    #allocation13 [shape = 'u8[8192]{0}', space=vmem, size = 0x2000, scoped, tag = 'output window, operand 0']
    %12 = vsyncpa [#allocation3], 0
    %s13 = scalar_lea.sflag [#allocation3], 1
    %14 = vsyncpa %s13, 0
    %15 = vsyncpa [#allocation6], 0
    %16 = vsyncpa [#allocation9], 0
    %17 = vsyncpa [#allocation12], 0
    %18 = vsyncpa [#allocation4], 0
    %s19 = scalar_lea.sflag [#allocation4], 1
    %20 = vsyncpa %s19, 0
    loop: start=0, step=1, limit=4
    $region2: #{tpu_custom_call.1} parent=1 // loop_pre_header
      _
    $region3: #{tpu_custom_call.1} parent=1 // loop_header
      %s22 = sphi 0, %s26
      %p23 = scmp.ge.s32.totalorder %s22, 4
      %s32 = sphi 0, %s34
      %s35 = sphi 0, %s32
      %s36 = sphi 0, %s35
      %s52 = sphi 0, %s36
      %s56 = sphi 0, %s56
      %s58 = sphi 0, %s56
      %s59 = sphi 0, %s58
      %s73 = sphi 0, %s59
      %s77 = sphi 0, %s77
      %s79 = sphi 0, %s77
      %s80 = sphi 0, %s79
      %s94 = sphi 0, %s80
      %s98 = sphi 0, %s98
      %s100 = sphi 0, %s98
      %s101 = sphi 0, %s100
      %s115 = sphi 0, %s101
      %s119 = sphi 0, %s119
      %s121 = sphi 0, %s119
      %s122 = sphi 0, %s121
      %s136 = sphi 0, %s122
      %s140 = sphi 0, %s140
      %s142 = sphi 0, %s140
      %s143 = sphi 0, %s142
      %s157 = sphi 0, %s143
      %s161 = sphi 0, %s161
      %s163 = sphi 0, %s161
      %s164 = sphi 0, %s163
      %s178 = sphi 0, %s164
      %s184 = sphi 0, %s186
      %s187 = sphi 0, %s184
      %s188 = sphi 0, %s187
      %s204 = sphi 0, %s188
    $region4: #{tpu_custom_call.1} parent=1 // loop_header_branch
      %25 = sbr.rel (%p23) target = $region8
    $region5: #{tpu_custom_call.1} parent=1 // loop_body
      %s27 = ssub.s32 %s22, 1
      %s28 = ssub.s32 %s22, 2
      %s29 = sadd.s32 %s22, 1
      %s30 = ssub.s32 %s22, %s29
      %p31 = scmp.eq.s32.totalorder %s30, 0
      %s33 = sadd.s32 %s32, 1
      %s34 = scalar_select %p31, %s32, %s33
      %p37 = pneg %p31
      %p38 = scmp.eq.s32.totalorder %s22, 1
      %p39 = por %p37, %p38
      %p40 = scmp.ne.s32.totalorder %s32, %s35
      %p41 = scmp.eq.s32.totalorder %s22, 0
      %p42 = por %p40, %p41
      %p43 = scmp.ne.s32.totalorder %s32, %s35
      %p44 = scmp.eq.s32.totalorder %s27, 1
      %p45 = por %p43, %p44
      %p46 = scmp.ne.s32.totalorder %s35, %s36
      %p47 = scmp.eq.s32.totalorder %s27, 0
      %p48 = por %p46, %p47
      %p49 = scmp.ne.s32.totalorder %s35, %s36
      %p50 = scmp.eq.s32.totalorder %s28, 1
      %p51 = por %p49, %p50
      %p53 = scmp.ne.s32.totalorder %s36, %s52
      %p54 = scmp.eq.s32.totalorder %s28, 0
      %p55 = por %p53, %p54
      %s57 = sadd.s32 %s56, 1
      %p60 = scmp.eq.s32.totalorder %s22, 1
      %p61 = scmp.ne.s32.totalorder %s56, %s58
      %p62 = scmp.eq.s32.totalorder %s22, 0
      %p63 = por %p61, %p62
      %p64 = scmp.ne.s32.totalorder %s56, %s58
      %p65 = scmp.eq.s32.totalorder %s27, 1
      %p66 = por %p64, %p65
      %p67 = scmp.ne.s32.totalorder %s58, %s59
      %p68 = scmp.eq.s32.totalorder %s27, 0
      %p69 = por %p67, %p68
      %p70 = scmp.ne.s32.totalorder %s58, %s59
      %p71 = scmp.eq.s32.totalorder %s28, 1
      %p72 = por %p70, %p71
      %p74 = scmp.ne.s32.totalorder %s59, %s73
      %p75 = scmp.eq.s32.totalorder %s28, 0
      %p76 = por %p74, %p75
      %s78 = sadd.s32 %s77, 1
      %p81 = scmp.eq.s32.totalorder %s22, 1
      %p82 = scmp.ne.s32.totalorder %s77, %s79
      %p83 = scmp.eq.s32.totalorder %s22, 0
      %p84 = por %p82, %p83
      %p85 = scmp.ne.s32.totalorder %s77, %s79
      %p86 = scmp.eq.s32.totalorder %s27, 1
      %p87 = por %p85, %p86
      %p88 = scmp.ne.s32.totalorder %s79, %s80
      %p89 = scmp.eq.s32.totalorder %s27, 0
      %p90 = por %p88, %p89
      %p91 = scmp.ne.s32.totalorder %s79, %s80
      %p92 = scmp.eq.s32.totalorder %s28, 1
      %p93 = por %p91, %p92
      %p95 = scmp.ne.s32.totalorder %s80, %s94
      %p96 = scmp.eq.s32.totalorder %s28, 0
      %p97 = por %p95, %p96
      %s99 = sadd.s32 %s98, 1
      %p102 = scmp.eq.s32.totalorder %s22, 1
      %p103 = scmp.ne.s32.totalorder %s98, %s100
      %p104 = scmp.eq.s32.totalorder %s22, 0
      %p105 = por %p103, %p104
      %p106 = scmp.ne.s32.totalorder %s98, %s100
      %p107 = scmp.eq.s32.totalorder %s27, 1
      %p108 = por %p106, %p107
      %p109 = scmp.ne.s32.totalorder %s100, %s101
      %p110 = scmp.eq.s32.totalorder %s27, 0
      %p111 = por %p109, %p110
      %p112 = scmp.ne.s32.totalorder %s100, %s101
      %p113 = scmp.eq.s32.totalorder %s28, 1
      %p114 = por %p112, %p113
      %p116 = scmp.ne.s32.totalorder %s101, %s115
      %p117 = scmp.eq.s32.totalorder %s28, 0
      %p118 = por %p116, %p117
      %s120 = sadd.s32 %s119, 1
      %p123 = scmp.eq.s32.totalorder %s22, 1
      %p124 = scmp.ne.s32.totalorder %s119, %s121
      %p125 = scmp.eq.s32.totalorder %s22, 0
      %p126 = por %p124, %p125
      %p127 = scmp.ne.s32.totalorder %s119, %s121
      %p128 = scmp.eq.s32.totalorder %s27, 1
      %p129 = por %p127, %p128
      %p130 = scmp.ne.s32.totalorder %s121, %s122
      %p131 = scmp.eq.s32.totalorder %s27, 0
      %p132 = por %p130, %p131
      %p133 = scmp.ne.s32.totalorder %s121, %s122
      %p134 = scmp.eq.s32.totalorder %s28, 1
      %p135 = por %p133, %p134
      %p137 = scmp.ne.s32.totalorder %s122, %s136
      %p138 = scmp.eq.s32.totalorder %s28, 0
      %p139 = por %p137, %p138
      %s141 = sadd.s32 %s140, 1
      %p144 = scmp.eq.s32.totalorder %s22, 1
      %p145 = scmp.ne.s32.totalorder %s140, %s142
      %p146 = scmp.eq.s32.totalorder %s22, 0
      %p147 = por %p145, %p146
      %p148 = scmp.ne.s32.totalorder %s140, %s142
      %p149 = scmp.eq.s32.totalorder %s27, 1
      %p150 = por %p148, %p149
      %p151 = scmp.ne.s32.totalorder %s142, %s143
      %p152 = scmp.eq.s32.totalorder %s27, 0
      %p153 = por %p151, %p152
      %p154 = scmp.ne.s32.totalorder %s142, %s143
      %p155 = scmp.eq.s32.totalorder %s28, 1
      %p156 = por %p154, %p155
      %p158 = scmp.ne.s32.totalorder %s143, %s157
      %p159 = scmp.eq.s32.totalorder %s28, 0
      %p160 = por %p158, %p159
      %s162 = sadd.s32 %s161, 1
      %p165 = scmp.eq.s32.totalorder %s22, 1
      %p166 = scmp.ne.s32.totalorder %s161, %s163
      %p167 = scmp.eq.s32.totalorder %s22, 0
      %p168 = por %p166, %p167
      %p169 = scmp.ne.s32.totalorder %s161, %s163
      %p170 = scmp.eq.s32.totalorder %s27, 1
      %p171 = por %p169, %p170
      %p172 = scmp.ne.s32.totalorder %s163, %s164
      %p173 = scmp.eq.s32.totalorder %s27, 0
      %p174 = por %p172, %p173
      %p175 = scmp.ne.s32.totalorder %s163, %s164
      %p176 = scmp.eq.s32.totalorder %s28, 1
      %p177 = por %p175, %p176
      %p179 = scmp.ne.s32.totalorder %s164, %s178
      %p180 = scmp.eq.s32.totalorder %s28, 0
      %p181 = por %p179, %p180
      %s182 = ssub.s32 %s22, %s29
      %p183 = scmp.eq.s32.totalorder %s182, 0
      %s185 = sadd.s32 %s184, 1
      %s186 = scalar_select %p183, %s184, %s185
      %p189 = pneg %p183
      %p190 = scmp.eq.s32.totalorder %s22, 1
      %p191 = por %p189, %p190
      %p192 = scmp.ne.s32.totalorder %s184, %s187
      %p193 = scmp.eq.s32.totalorder %s22, 0
      %p194 = por %p192, %p193
      %p195 = scmp.ne.s32.totalorder %s184, %s187
      %p196 = scmp.eq.s32.totalorder %s27, 1
      %p197 = por %p195, %p196
      %p198 = scmp.ne.s32.totalorder %s187, %s188
      %p199 = scmp.eq.s32.totalorder %s27, 0
      %p200 = por %p198, %p199
      %p201 = scmp.ne.s32.totalorder %s187, %s188
      %p202 = scmp.eq.s32.totalorder %s28, 1
      %p203 = por %p201, %p202
      %p205 = scmp.ne.s32.totalorder %s188, %s204
      %p206 = scmp.eq.s32.totalorder %s28, 0
      %p207 = por %p205, %p206
      %p208 = scmp.le.s32.totalorder 1, %s22
      %p209 = scmp.lt.s32.totalorder %s22, 3
      %p210 = pnand %p208, %p209
      %p211 = pneg %p210
      // Predicated region
      $region9: #{tpu_custom_call.1} parent=5 // pred_check
        _
      $region10: #{tpu_custom_call.1} parent=5 // pred_check_branch
        %213 = sbr.rel (%p210) target = $region12
      $region11: #{tpu_custom_call.1} parent=5 // pred_region
        %s214 = ssub.s32 %s22, 1
        // Predicated region
        $region13: #{tpu_custom_call.1} parent=11 // pred_check
          %p215 = pneg %p69
        $region14: #{tpu_custom_call.1} parent=11 // pred_check_branch
          %217 = sbr.rel (%p215) target = $region16
        $region15: #{tpu_custom_call.1} parent=11 // pred_region
          %219 = vsyncadd [#allocation6], 0
          %s220 = sshll.u32 %s1, 4
          %s221 = int_to_ptr.hbm [resolvable:$true] %s220
          %s222 = sshll.u32 [#allocation5], 4
          %s223 = int_to_ptr.vmem [resolvable:$true] %s222
          %228 = dma.hbm_to_vmem [thread:$0]  %s221, 2048, %s223, [#allocation6], 512, 512, 32
        $region16: #{tpu_custom_call.1} parent=11 // pred_fallthru
          _
        // Predicated region
        $region17: #{tpu_custom_call.1} parent=11 // pred_check
          %p229 = pneg %p90
        $region18: #{tpu_custom_call.1} parent=11 // pred_check_branch
          %231 = sbr.rel (%p229) target = $region20
        $region19: #{tpu_custom_call.1} parent=11 // pred_region
          %233 = vsyncadd [#allocation6], 0
          %s235 = sshll.u32 %s2, 4
          %s236 = int_to_ptr.hbm [resolvable:$true] %s235
          %s237 = sshll.u32 [#allocation7], 4
          %s238 = int_to_ptr.vmem [resolvable:$true] %s237
          %240 = dma.hbm_to_vmem [thread:$0]  %s236, 64, %s238, [#allocation6]
        $region20: #{tpu_custom_call.1} parent=11 // pred_fallthru
          _
        // Predicated region
        $region21: #{tpu_custom_call.1} parent=11 // pred_check
          %p241 = pneg %p111
        $region22: #{tpu_custom_call.1} parent=11 // pred_check_branch
          %243 = sbr.rel (%p241) target = $region24
        $region23: #{tpu_custom_call.1} parent=11 // pred_region
          %245 = vsyncadd [#allocation9], 0
          %s246 = sshll.u32 %s3, 4
          %s247 = int_to_ptr.hbm [resolvable:$true] %s246
          %s248 = sshll.u32 [#allocation8], 4
          %s249 = int_to_ptr.vmem [resolvable:$true] %s248
          %254 = dma.hbm_to_vmem [thread:$0]  %s247, 16384, %s249, [#allocation9], 256, 256, 16
        $region24: #{tpu_custom_call.1} parent=11 // pred_fallthru
          _
        // Predicated region
        $region25: #{tpu_custom_call.1} parent=11 // pred_check
          %p255 = pneg %p132
        $region26: #{tpu_custom_call.1} parent=11 // pred_check_branch
          %257 = sbr.rel (%p255) target = $region28
        $region27: #{tpu_custom_call.1} parent=11 // pred_region
          %259 = vsyncadd [#allocation9], 0
          %s261 = sshll.u32 %s4, 4
          %s262 = int_to_ptr.hbm [resolvable:$true] %s261
          %s263 = sshll.u32 [#allocation10], 4
          %s264 = int_to_ptr.vmem [resolvable:$true] %s263
          %266 = dma.hbm_to_vmem [thread:$0]  %s262, 64, %s264, [#allocation9]
        $region28: #{tpu_custom_call.1} parent=11 // pred_fallthru
          _
        // Predicated region
        $region29: #{tpu_custom_call.1} parent=11 // pred_check
          %p267 = pneg %p153
        $region30: #{tpu_custom_call.1} parent=11 // pred_check_branch
          %269 = sbr.rel (%p267) target = $region32
        $region31: #{tpu_custom_call.1} parent=11 // pred_region
          %271 = vsyncadd [#allocation12], 0
          %s272 = sshll.u32 %s5, 4
          %s273 = int_to_ptr.hbm [resolvable:$true] %s272
          %s274 = sshll.u32 [#allocation11], 4
          %s275 = int_to_ptr.vmem [resolvable:$true] %s274
          %280 = dma.hbm_to_vmem [thread:$0]  %s273, 4096, %s275, [#allocation12], 64, 64, 4
        $region32: #{tpu_custom_call.1} parent=11 // pred_fallthru
          _
        // Predicated region
        $region33: #{tpu_custom_call.1} parent=11 // pred_check
          %p281 = pneg %p174
        $region34: #{tpu_custom_call.1} parent=11 // pred_check_branch
          %283 = sbr.rel (%p281) target = $region36
        $region35: #{tpu_custom_call.1} parent=11 // pred_region
          _
        $region36: #{tpu_custom_call.1} parent=11 // pred_fallthru
          _
      $region12: #{tpu_custom_call.1} parent=5 // pred_fallthru
        _
      %p284 = scmp.lt.s32.totalorder %s22, 2
      // Predicated region
      $region37: #{tpu_custom_call.1} parent=5 // pred_check
        %p285 = pneg %p284
      $region38: #{tpu_custom_call.1} parent=5 // pred_check_branch
        %287 = sbr.rel (%p285) target = $region40
      $region39: #{tpu_custom_call.1} parent=5 // pred_region
        // Predicated region
        $region41: #{tpu_custom_call.1} parent=39 // pred_check
          %p288 = pneg %p42
        $region42: #{tpu_custom_call.1} parent=39 // pred_check_branch
          %290 = sbr.rel (%p288) target = $region44
        $region43: #{tpu_custom_call.1} parent=39 // pred_region
          %s291 = sand.u32 %s32, 1
          %s292 = scalar_lea.sflag [#allocation3], %s291
          %s293 = sand.u32 %s32, 1
          %s294 = smul.addr %s293, 8
          %s295 = scalar_lea.vmem [#allocation2], %s294
          %297 = vsyncadd %s292, 0
          %s298 = smul.addr %s22, 8
          %s299 = scalar_lea.hbm %s0, %s298
          %s301 = sshll.u32 %s299, 4
          %s302 = int_to_ptr.hbm [resolvable:$true] %s301
          %s303 = sshll.u32 %s295, 4
          %s304 = int_to_ptr.vmem [resolvable:$true] %s303
          %306 = dma.hbm_to_vmem [thread:$0]  %s302, 128, %s304, %s292
        $region44: #{tpu_custom_call.1} parent=39 // pred_fallthru
          _
      $region40: #{tpu_custom_call.1} parent=5 // pred_fallthru
        _
      %p307 = scmp.le.s32.totalorder 1, %s22
      %p308 = scmp.lt.s32.totalorder %s22, 3
      %p309 = pnand %p307, %p308
      %p310 = pneg %p309
      // Predicated region
      $region45: #{tpu_custom_call.1} parent=5 // pred_check
        _
      $region46: #{tpu_custom_call.1} parent=5 // pred_check_branch
        %312 = sbr.rel (%p309) target = $region48
      $region47: #{tpu_custom_call.1} parent=5 // pred_region
        %s313 = ssub.s32 %s22, 1
        %s314 = sand.u32 %s35, 1
        %s315 = scalar_lea.sflag [#allocation3], %s314
        %s316 = sand.u32 %s35, 1
        %s317 = smul.addr %s316, 8
        %s318 = scalar_lea.vmem [#allocation2], %s317
        // Predicated region
        $region49: #{tpu_custom_call.1} parent=47 // pred_check
          %p319 = pneg %p48
        $region50: #{tpu_custom_call.1} parent=47 // pred_check_branch
          %321 = sbr.rel (%p319) target = $region52
        $region51: #{tpu_custom_call.1} parent=47 // pred_region
          %323 = dma.done %s315, 128
        $region52: #{tpu_custom_call.1} parent=47 // pred_fallthru
          _
        // Predicated region
        $region53: #{tpu_custom_call.1} parent=47 // pred_check
          %p324 = pneg %p69
        $region54: #{tpu_custom_call.1} parent=47 // pred_check_branch
          %326 = sbr.rel (%p324) target = $region56
        $region55: #{tpu_custom_call.1} parent=47 // pred_region
          %328 = dma.done [#allocation6], 2048
        $region56: #{tpu_custom_call.1} parent=47 // pred_fallthru
          _
        // Predicated region
        $region57: #{tpu_custom_call.1} parent=47 // pred_check
          %p329 = pneg %p90
        $region58: #{tpu_custom_call.1} parent=47 // pred_check_branch
          %331 = sbr.rel (%p329) target = $region60
        $region59: #{tpu_custom_call.1} parent=47 // pred_region
          %333 = dma.done [#allocation6], 64
        $region60: #{tpu_custom_call.1} parent=47 // pred_fallthru
          _
        // Predicated region
        $region61: #{tpu_custom_call.1} parent=47 // pred_check
          %p334 = pneg %p111
        $region62: #{tpu_custom_call.1} parent=47 // pred_check_branch
          %336 = sbr.rel (%p334) target = $region64
        $region63: #{tpu_custom_call.1} parent=47 // pred_region
          %338 = dma.done [#allocation9], 16384
        $region64: #{tpu_custom_call.1} parent=47 // pred_fallthru
          _
        // Predicated region
        $region65: #{tpu_custom_call.1} parent=47 // pred_check
          %p339 = pneg %p132
        $region66: #{tpu_custom_call.1} parent=47 // pred_check_branch
          %341 = sbr.rel (%p339) target = $region68
        $region67: #{tpu_custom_call.1} parent=47 // pred_region
          %343 = dma.done [#allocation9], 64
        $region68: #{tpu_custom_call.1} parent=47 // pred_fallthru
          _
        // Predicated region
        $region69: #{tpu_custom_call.1} parent=47 // pred_check
          %p344 = pneg %p153
        $region70: #{tpu_custom_call.1} parent=47 // pred_check_branch
          %346 = sbr.rel (%p344) target = $region72
        $region71: #{tpu_custom_call.1} parent=47 // pred_region
          %348 = dma.done [#allocation12], 4096
        $region72: #{tpu_custom_call.1} parent=47 // pred_fallthru
          _
        %s349 = sand.u32 %s35, 1
        %s350 = scalar_lea.sflag [#allocation3], %s349
        %s351 = sand.u32 %s35, 1
        %s352 = smul.addr %s351, 8
        %s353 = scalar_lea.vmem [#allocation2], %s352
        %p354 = pneg %p48
        %p355 = pneg %p45
        %p356 = pneg %p69
        %p357 = pneg %p66
        %p358 = pneg %p90
        %p359 = pneg %p87
        %p360 = pneg %p111
        %p361 = pneg %p108
        %p362 = pneg %p132
        %p363 = pneg %p129
        %p364 = pneg %p153
        %p365 = pneg %p150
        %p366 = pneg %p174
        %p367 = pneg %p171
        %p368 = pneg %p200
        %p369 = pneg %p197
        %s370 = sand.u32 %s187, 1
        %s371 = scalar_lea.sflag [#allocation4], %s370
        %s372 = sand.u32 %s187, 1
        %s373 = smul.addr %s372, 8
        %s374 = scalar_lea.vmem [#allocation13], %s373
        %v375 = vld [vmem:[%s318] sm:$0xff]
        %v376 = vld [vmem:[#allocation5] sm:$0xff]
        %v377 = vld [vmem:[#allocation5 + $0x8] sm:$0xff]
        %v378 = vld [vmem:[#allocation5 + $0x10] sm:$0xff]
        %v379 = vld [vmem:[#allocation5 + $0x18] sm:$0xff]
        %v380 = vld [vmem:[#allocation5 + $0x20] sm:$0xff]
        %v381 = vld [vmem:[#allocation5 + $0x28] sm:$0xff]
        %v382 = vld [vmem:[#allocation5 + $0x30] sm:$0xff]
        %v383 = vld [vmem:[#allocation5 + $0x38] sm:$0xff]
        %v384 = vld [vmem:[#allocation5 + $0x40] sm:$0xff]
        %v385 = vld [vmem:[#allocation5 + $0x48] sm:$0xff]
        %v386 = vld [vmem:[#allocation5 + $0x50] sm:$0xff]
        %v387 = vld [vmem:[#allocation5 + $0x58] sm:$0xff]
        %v388 = vld [vmem:[#allocation5 + $0x60] sm:$0xff]
        %v389 = vld [vmem:[#allocation5 + $0x68] sm:$0xff]
        %v390 = vld [vmem:[#allocation5 + $0x70] sm:$0xff]
        %v391 = vld [vmem:[#allocation5 + $0x78] sm:$0xff]
        %v392 = vld [vmem:[#allocation7] sm:$0xf]
        %v394 = vperm.slane %v392, 0
        %v395 = vperm.slane %v392, 1
        %v396 = vperm.slane %v392, 2
        %v397 = vperm.slane %v392, 3
        %vm402 = vcmask 261120
        %v404 = vsel %vm402, %v375, 0
        %406 = vmatpush.msra.mxu0 0.0
        %407 = vmatpush.msra.mxu0 0.0
        %408 = vmatpush.msra.mxu0 0.0
        %409 = vmatpush.msra.mxu0 0.0
        %410 = vmatpush.msra.mxu0 0.0
        %411 = vmatpush.msra.mxu0 0.0
        %412 = vmatpush.msra.mxu0 0.0
        %413 = vmatpush.msra.mxu0 0.0
        %414 = vmatpush.msra.mxu0 0.0
        %415 = vmatpush.msra.mxu0 0.0
        %416 = vmatpush.msra.mxu0 0.0
        %417 = vmatpush.msra.mxu0 0.0
        %418 = vmatpush.msra.mxu0 %v388
        %419 = vmatpush.msra.mxu0 %v384
        %420 = vmatpush.msra.mxu0 %v380
        %421 = vmatpush.msra.mxu0 %v376
        %422 = vmatmul.f32.gmra.mxu0 %v404
        %v423 = vpop.f32.mrf.mxu0
        %v424 = vadd.f32 %v394, %v423
        %425 = vdwg.mxu0
        %426 = vmatpush.msra.mxu0 0.0
        %427 = vmatpush.msra.mxu0 0.0
        %428 = vmatpush.msra.mxu0 0.0
        %429 = vmatpush.msra.mxu0 0.0
        %430 = vmatpush.msra.mxu0 0.0
        %431 = vmatpush.msra.mxu0 0.0
        %432 = vmatpush.msra.mxu0 0.0
        %433 = vmatpush.msra.mxu0 0.0
        %434 = vmatpush.msra.mxu0 0.0
        %435 = vmatpush.msra.mxu0 0.0
        %436 = vmatpush.msra.mxu0 0.0
        %437 = vmatpush.msra.mxu0 0.0
        %438 = vmatpush.msra.mxu0 %v389
        %439 = vmatpush.msra.mxu0 %v385
        %440 = vmatpush.msra.mxu0 %v381
        %441 = vmatpush.msra.mxu0 %v377
        %442 = vmatmul.f32.gmra.mxu0 %v404
        %v443 = vpop.f32.mrf.mxu0
        %v444 = vadd.f32 %v395, %v443
        %445 = vdwg.mxu0
        %446 = vmatpush.msra.mxu0 0.0
        %447 = vmatpush.msra.mxu0 0.0
        %448 = vmatpush.msra.mxu0 0.0
        %449 = vmatpush.msra.mxu0 0.0
        %450 = vmatpush.msra.mxu0 0.0
        %451 = vmatpush.msra.mxu0 0.0
        %452 = vmatpush.msra.mxu0 0.0
        %453 = vmatpush.msra.mxu0 0.0
        %454 = vmatpush.msra.mxu0 0.0
        %455 = vmatpush.msra.mxu0 0.0
        %456 = vmatpush.msra.mxu0 0.0
        %457 = vmatpush.msra.mxu0 0.0
        %458 = vmatpush.msra.mxu0 %v390
        %459 = vmatpush.msra.mxu0 %v386
        %460 = vmatpush.msra.mxu0 %v382
        %461 = vmatpush.msra.mxu0 %v378
        %462 = vmatmul.f32.gmra.mxu0 %v404
        %v463 = vpop.f32.mrf.mxu0
        %v464 = vadd.f32 %v396, %v463
        %465 = vdwg.mxu0
        %466 = vmatpush.msra.mxu0 0.0
        %467 = vmatpush.msra.mxu0 0.0
        %468 = vmatpush.msra.mxu0 0.0
        %469 = vmatpush.msra.mxu0 0.0
        %470 = vmatpush.msra.mxu0 0.0
        %471 = vmatpush.msra.mxu0 0.0
        %472 = vmatpush.msra.mxu0 0.0
        %473 = vmatpush.msra.mxu0 0.0
        %474 = vmatpush.msra.mxu0 0.0
        %475 = vmatpush.msra.mxu0 0.0
        %476 = vmatpush.msra.mxu0 0.0
        %477 = vmatpush.msra.mxu0 0.0
        %478 = vmatpush.msra.mxu0 %v391
        %479 = vmatpush.msra.mxu0 %v387
        %480 = vmatpush.msra.mxu0 %v383
        %481 = vmatpush.msra.mxu0 %v379
        %482 = vmatmul.f32.gmra.mxu0 %v404
        %v483 = vpop.f32.mrf.mxu0
        %v484 = vadd.f32 %v397, %v483
        %485 = vdwg.mxu0
        %v486 = vmax.f32 %v424, 0.0
        %v487 = vmax.f32 %v444, 0.0
        %v488 = vmax.f32 %v464, 0.0
        %v489 = vmax.f32 %v484, 0.0
        %v490 = vpack.c.bf16 %v486, %v486
        %v491 = vpack.c.bf16 %v487, %v487
        %v492 = vpack.c.bf16 %v488, %v488
        %v493 = vpack.c.bf16 %v489, %v489
        %v494 = vld [vmem:[#allocation8] sm:$0xff]
        %v495 = vld [vmem:[#allocation8 + $0x8] sm:$0xff]
        %v496 = vld [vmem:[#allocation8 + $0x10] sm:$0xff]
        %v497 = vld [vmem:[#allocation8 + $0x18] sm:$0xff]
        %v498 = vld [vmem:[#allocation8 + $0x20] sm:$0xff]
        %v499 = vld [vmem:[#allocation8 + $0x28] sm:$0xff]
        %v500 = vld [vmem:[#allocation8 + $0x30] sm:$0xff]
        %v501 = vld [vmem:[#allocation8 + $0x38] sm:$0xff]
        %v502 = vld [vmem:[#allocation8 + $0x40] sm:$0xff]
        %v503 = vld [vmem:[#allocation8 + $0x48] sm:$0xff]
        %v504 = vld [vmem:[#allocation8 + $0x50] sm:$0xff]
        %v505 = vld [vmem:[#allocation8 + $0x58] sm:$0xff]
        %v506 = vld [vmem:[#allocation8 + $0x60] sm:$0xff]
        %v507 = vld [vmem:[#allocation8 + $0x68] sm:$0xff]
        %v508 = vld [vmem:[#allocation8 + $0x70] sm:$0xff]
        %v509 = vld [vmem:[#allocation8 + $0x78] sm:$0xff]
        %v510 = vld [vmem:[#allocation8 + $0x80] sm:$0xff]
        %v511 = vld [vmem:[#allocation8 + $0x88] sm:$0xff]
        %v512 = vld [vmem:[#allocation8 + $0x90] sm:$0xff]
        %v513 = vld [vmem:[#allocation8 + $0x98] sm:$0xff]
        %v514 = vld [vmem:[#allocation8 + $0xa0] sm:$0xff]
        %v515 = vld [vmem:[#allocation8 + $0xa8] sm:$0xff]
        %v516 = vld [vmem:[#allocation8 + $0xb0] sm:$0xff]
        %v517 = vld [vmem:[#allocation8 + $0xb8] sm:$0xff]
        %v518 = vld [vmem:[#allocation8 + $0xc0] sm:$0xff]
        %v519 = vld [vmem:[#allocation8 + $0xc8] sm:$0xff]
        %v520 = vld [vmem:[#allocation8 + $0xd0] sm:$0xff]
        %v521 = vld [vmem:[#allocation8 + $0xd8] sm:$0xff]
        %v522 = vld [vmem:[#allocation8 + $0xe0] sm:$0xff]
        %v523 = vld [vmem:[#allocation8 + $0xe8] sm:$0xff]
        %v524 = vld [vmem:[#allocation8 + $0xf0] sm:$0xff]
        %v525 = vld [vmem:[#allocation8 + $0xf8] sm:$0xff]
        %v526 = vld [vmem:[#allocation8 + $0x100] sm:$0xff]
        %v527 = vld [vmem:[#allocation8 + $0x108] sm:$0xff]
        %v528 = vld [vmem:[#allocation8 + $0x110] sm:$0xff]
        %v529 = vld [vmem:[#allocation8 + $0x118] sm:$0xff]
        %v530 = vld [vmem:[#allocation8 + $0x120] sm:$0xff]
        %v531 = vld [vmem:[#allocation8 + $0x128] sm:$0xff]
        %v532 = vld [vmem:[#allocation8 + $0x130] sm:$0xff]
        %v533 = vld [vmem:[#allocation8 + $0x138] sm:$0xff]
        %v534 = vld [vmem:[#allocation8 + $0x140] sm:$0xff]
        %v535 = vld [vmem:[#allocation8 + $0x148] sm:$0xff]
        %v536 = vld [vmem:[#allocation8 + $0x150] sm:$0xff]
        %v537 = vld [vmem:[#allocation8 + $0x158] sm:$0xff]
        %v538 = vld [vmem:[#allocation8 + $0x160] sm:$0xff]
        %v539 = vld [vmem:[#allocation8 + $0x168] sm:$0xff]
        %v540 = vld [vmem:[#allocation8 + $0x170] sm:$0xff]
        %v541 = vld [vmem:[#allocation8 + $0x178] sm:$0xff]
        %v542 = vld [vmem:[#allocation8 + $0x180] sm:$0xff]
        %v543 = vld [vmem:[#allocation8 + $0x188] sm:$0xff]
        %v544 = vld [vmem:[#allocation8 + $0x190] sm:$0xff]
        %v545 = vld [vmem:[#allocation8 + $0x198] sm:$0xff]
        %v546 = vld [vmem:[#allocation8 + $0x1a0] sm:$0xff]
        %v547 = vld [vmem:[#allocation8 + $0x1a8] sm:$0xff]
        %v548 = vld [vmem:[#allocation8 + $0x1b0] sm:$0xff]
        %v549 = vld [vmem:[#allocation8 + $0x1b8] sm:$0xff]
        %v550 = vld [vmem:[#allocation8 + $0x1c0] sm:$0xff]
        %v551 = vld [vmem:[#allocation8 + $0x1c8] sm:$0xff]
        %v552 = vld [vmem:[#allocation8 + $0x1d0] sm:$0xff]
        %v553 = vld [vmem:[#allocation8 + $0x1d8] sm:$0xff]
        %v554 = vld [vmem:[#allocation8 + $0x1e0] sm:$0xff]
        %v555 = vld [vmem:[#allocation8 + $0x1e8] sm:$0xff]
        %v556 = vld [vmem:[#allocation8 + $0x1f0] sm:$0xff]
        %v557 = vld [vmem:[#allocation8 + $0x1f8] sm:$0xff]
        %v558 = vld [vmem:[#allocation8 + $0x200] sm:$0xff]
        %v559 = vld [vmem:[#allocation8 + $0x208] sm:$0xff]
        %v560 = vld [vmem:[#allocation8 + $0x210] sm:$0xff]
        %v561 = vld [vmem:[#allocation8 + $0x218] sm:$0xff]
        %v562 = vld [vmem:[#allocation8 + $0x220] sm:$0xff]
        %v563 = vld [vmem:[#allocation8 + $0x228] sm:$0xff]
        %v564 = vld [vmem:[#allocation8 + $0x230] sm:$0xff]
        %v565 = vld [vmem:[#allocation8 + $0x238] sm:$0xff]
        %v566 = vld [vmem:[#allocation8 + $0x240] sm:$0xff]
        %v567 = vld [vmem:[#allocation8 + $0x248] sm:$0xff]
        %v568 = vld [vmem:[#allocation8 + $0x250] sm:$0xff]
        %v569 = vld [vmem:[#allocation8 + $0x258] sm:$0xff]
        %v570 = vld [vmem:[#allocation8 + $0x260] sm:$0xff]
        %v571 = vld [vmem:[#allocation8 + $0x268] sm:$0xff]
        %v572 = vld [vmem:[#allocation8 + $0x270] sm:$0xff]
        %v573 = vld [vmem:[#allocation8 + $0x278] sm:$0xff]
        %v574 = vld [vmem:[#allocation8 + $0x280] sm:$0xff]
        %v575 = vld [vmem:[#allocation8 + $0x288] sm:$0xff]
        %v576 = vld [vmem:[#allocation8 + $0x290] sm:$0xff]
        %v577 = vld [vmem:[#allocation8 + $0x298] sm:$0xff]
        %v578 = vld [vmem:[#allocation8 + $0x2a0] sm:$0xff]
        %v579 = vld [vmem:[#allocation8 + $0x2a8] sm:$0xff]
        %v580 = vld [vmem:[#allocation8 + $0x2b0] sm:$0xff]
        %v581 = vld [vmem:[#allocation8 + $0x2b8] sm:$0xff]
        %v582 = vld [vmem:[#allocation8 + $0x2c0] sm:$0xff]
        %v583 = vld [vmem:[#allocation8 + $0x2c8] sm:$0xff]
        %v584 = vld [vmem:[#allocation8 + $0x2d0] sm:$0xff]
        %v585 = vld [vmem:[#allocation8 + $0x2d8] sm:$0xff]
        %v586 = vld [vmem:[#allocation8 + $0x2e0] sm:$0xff]
        %v587 = vld [vmem:[#allocation8 + $0x2e8] sm:$0xff]
        %v588 = vld [vmem:[#allocation8 + $0x2f0] sm:$0xff]
        %v589 = vld [vmem:[#allocation8 + $0x2f8] sm:$0xff]
        %v590 = vld [vmem:[#allocation8 + $0x300] sm:$0xff]
        %v591 = vld [vmem:[#allocation8 + $0x308] sm:$0xff]
        %v592 = vld [vmem:[#allocation8 + $0x310] sm:$0xff]
        %v593 = vld [vmem:[#allocation8 + $0x318] sm:$0xff]
        %v594 = vld [vmem:[#allocation8 + $0x320] sm:$0xff]
        %v595 = vld [vmem:[#allocation8 + $0x328] sm:$0xff]
        %v596 = vld [vmem:[#allocation8 + $0x330] sm:$0xff]
        %v597 = vld [vmem:[#allocation8 + $0x338] sm:$0xff]
        %v598 = vld [vmem:[#allocation8 + $0x340] sm:$0xff]
        %v599 = vld [vmem:[#allocation8 + $0x348] sm:$0xff]
        %v600 = vld [vmem:[#allocation8 + $0x350] sm:$0xff]
        %v601 = vld [vmem:[#allocation8 + $0x358] sm:$0xff]
        %v602 = vld [vmem:[#allocation8 + $0x360] sm:$0xff]
        %v603 = vld [vmem:[#allocation8 + $0x368] sm:$0xff]
        %v604 = vld [vmem:[#allocation8 + $0x370] sm:$0xff]
        %v605 = vld [vmem:[#allocation8 + $0x378] sm:$0xff]
        %v606 = vld [vmem:[#allocation8 + $0x380] sm:$0xff]
        %v607 = vld [vmem:[#allocation8 + $0x388] sm:$0xff]
        %v608 = vld [vmem:[#allocation8 + $0x390] sm:$0xff]
        %v609 = vld [vmem:[#allocation8 + $0x398] sm:$0xff]
        %v610 = vld [vmem:[#allocation8 + $0x3a0] sm:$0xff]
        %v611 = vld [vmem:[#allocation8 + $0x3a8] sm:$0xff]
        %v612 = vld [vmem:[#allocation8 + $0x3b0] sm:$0xff]
        %v613 = vld [vmem:[#allocation8 + $0x3b8] sm:$0xff]
        %v614 = vld [vmem:[#allocation8 + $0x3c0] sm:$0xff]
        %v615 = vld [vmem:[#allocation8 + $0x3c8] sm:$0xff]
        %v616 = vld [vmem:[#allocation8 + $0x3d0] sm:$0xff]
        %v617 = vld [vmem:[#allocation8 + $0x3d8] sm:$0xff]
        %v618 = vld [vmem:[#allocation8 + $0x3e0] sm:$0xff]
        %v619 = vld [vmem:[#allocation8 + $0x3e8] sm:$0xff]
        %v620 = vld [vmem:[#allocation8 + $0x3f0] sm:$0xff]
        %v621 = vld [vmem:[#allocation8 + $0x3f8] sm:$0xff]
        %v622 = vld [vmem:[#allocation10] sm:$0xf]
        %v624 = vperm.slane %v622, 0
        %v625 = vperm.slane %v622, 1
        %v626 = vperm.slane %v622, 2
        %v627 = vperm.slane %v622, 3
        %v760 = vunpack.c.l.b16 %v494
        %v761 = vunpack.c.h.b16 %v494
        %v762 = vunpack.c.l.b16 %v495
        %v763 = vunpack.c.h.b16 %v495
        %v764 = vunpack.c.l.b16 %v496
        %v765 = vunpack.c.h.b16 %v496
        %v766 = vunpack.c.l.b16 %v497
        %v767 = vunpack.c.h.b16 %v497
        %v768 = vunpack.c.l.b16 %v498
        %v769 = vunpack.c.h.b16 %v498
        %v770 = vunpack.c.l.b16 %v499
        %v771 = vunpack.c.h.b16 %v499
        %v772 = vunpack.c.l.b16 %v500
        %v773 = vunpack.c.h.b16 %v500
        %v774 = vunpack.c.l.b16 %v501
        %v775 = vunpack.c.h.b16 %v501
        %v776 = vunpack.c.l.b16 %v502
        %v777 = vunpack.c.h.b16 %v502
        %v778 = vunpack.c.l.b16 %v503
        %v779 = vunpack.c.h.b16 %v503
        %v780 = vunpack.c.l.b16 %v504
        %v781 = vunpack.c.h.b16 %v504
        %v782 = vunpack.c.l.b16 %v505
        %v783 = vunpack.c.h.b16 %v505
        %v784 = vunpack.c.l.b16 %v506
        %v785 = vunpack.c.h.b16 %v506
        %v786 = vunpack.c.l.b16 %v507
        %v787 = vunpack.c.h.b16 %v507
        %v788 = vunpack.c.l.b16 %v508
        %v789 = vunpack.c.h.b16 %v508
        %v790 = vunpack.c.l.b16 %v509
        %v791 = vunpack.c.h.b16 %v509
        %v792 = vunpack.c.l.b16 %v510
        %v793 = vunpack.c.h.b16 %v510
        %v794 = vunpack.c.l.b16 %v511
        %v795 = vunpack.c.h.b16 %v511
        %v796 = vunpack.c.l.b16 %v512
        %v797 = vunpack.c.h.b16 %v512
        %v798 = vunpack.c.l.b16 %v513
        %v799 = vunpack.c.h.b16 %v513
        %v800 = vunpack.c.l.b16 %v514
        %v801 = vunpack.c.h.b16 %v514
        %v802 = vunpack.c.l.b16 %v515
        %v803 = vunpack.c.h.b16 %v515
        %v804 = vunpack.c.l.b16 %v516
        %v805 = vunpack.c.h.b16 %v516
        %v806 = vunpack.c.l.b16 %v517
        %v807 = vunpack.c.h.b16 %v517
        %v808 = vunpack.c.l.b16 %v518
        %v809 = vunpack.c.h.b16 %v518
        %v810 = vunpack.c.l.b16 %v519
        %v811 = vunpack.c.h.b16 %v519
        %v812 = vunpack.c.l.b16 %v520
        %v813 = vunpack.c.h.b16 %v520
        %v814 = vunpack.c.l.b16 %v521
        %v815 = vunpack.c.h.b16 %v521
        %v816 = vunpack.c.l.b16 %v522
        %v817 = vunpack.c.h.b16 %v522
        %v818 = vunpack.c.l.b16 %v523
        %v819 = vunpack.c.h.b16 %v523
        %v820 = vunpack.c.l.b16 %v524
        %v821 = vunpack.c.h.b16 %v524
        %v822 = vunpack.c.l.b16 %v525
        %v823 = vunpack.c.h.b16 %v525
        %v824 = vunpack.c.l.b16 %v526
        %v825 = vunpack.c.h.b16 %v526
        %v826 = vunpack.c.l.b16 %v527
        %v827 = vunpack.c.h.b16 %v527
        %v828 = vunpack.c.l.b16 %v528
        %v829 = vunpack.c.h.b16 %v528
        %v830 = vunpack.c.l.b16 %v529
        %v831 = vunpack.c.h.b16 %v529
        %v832 = vunpack.c.l.b16 %v530
        %v833 = vunpack.c.h.b16 %v530
        %v834 = vunpack.c.l.b16 %v531
        %v835 = vunpack.c.h.b16 %v531
        %v836 = vunpack.c.l.b16 %v532
        %v837 = vunpack.c.h.b16 %v532
        %v838 = vunpack.c.l.b16 %v533
        %v839 = vunpack.c.h.b16 %v533
        %v840 = vunpack.c.l.b16 %v534
        %v841 = vunpack.c.h.b16 %v534
        %v842 = vunpack.c.l.b16 %v535
        %v843 = vunpack.c.h.b16 %v535
        %v844 = vunpack.c.l.b16 %v536
        %v845 = vunpack.c.h.b16 %v536
        %v846 = vunpack.c.l.b16 %v537
        %v847 = vunpack.c.h.b16 %v537
        %v848 = vunpack.c.l.b16 %v538
        %v849 = vunpack.c.h.b16 %v538
        %v850 = vunpack.c.l.b16 %v539
        %v851 = vunpack.c.h.b16 %v539
        %v852 = vunpack.c.l.b16 %v540
        %v853 = vunpack.c.h.b16 %v540
        %v854 = vunpack.c.l.b16 %v541
        %v855 = vunpack.c.h.b16 %v541
        %v856 = vunpack.c.l.b16 %v542
        %v857 = vunpack.c.h.b16 %v542
        %v858 = vunpack.c.l.b16 %v543
        %v859 = vunpack.c.h.b16 %v543
        %v860 = vunpack.c.l.b16 %v544
        %v861 = vunpack.c.h.b16 %v544
        %v862 = vunpack.c.l.b16 %v545
        %v863 = vunpack.c.h.b16 %v545
        %v864 = vunpack.c.l.b16 %v546
        %v865 = vunpack.c.h.b16 %v546
        %v866 = vunpack.c.l.b16 %v547
        %v867 = vunpack.c.h.b16 %v547
        %v868 = vunpack.c.l.b16 %v548
        %v869 = vunpack.c.h.b16 %v548
        %v870 = vunpack.c.l.b16 %v549
        %v871 = vunpack.c.h.b16 %v549
        %v872 = vunpack.c.l.b16 %v550
        %v873 = vunpack.c.h.b16 %v550
        %v874 = vunpack.c.l.b16 %v551
        %v875 = vunpack.c.h.b16 %v551
        %v876 = vunpack.c.l.b16 %v552
        %v877 = vunpack.c.h.b16 %v552
        %v878 = vunpack.c.l.b16 %v553
        %v879 = vunpack.c.h.b16 %v553
        %v880 = vunpack.c.l.b16 %v554
        %v881 = vunpack.c.h.b16 %v554
        %v882 = vunpack.c.l.b16 %v555
        %v883 = vunpack.c.h.b16 %v555
        %v884 = vunpack.c.l.b16 %v556
        %v885 = vunpack.c.h.b16 %v556
        %v886 = vunpack.c.l.b16 %v557
        %v887 = vunpack.c.h.b16 %v557
        %v888 = vunpack.c.l.b16 %v558
        %v889 = vunpack.c.h.b16 %v558
        %v890 = vunpack.c.l.b16 %v559
        %v891 = vunpack.c.h.b16 %v559
        %v892 = vunpack.c.l.b16 %v560
        %v893 = vunpack.c.h.b16 %v560
        %v894 = vunpack.c.l.b16 %v561
        %v895 = vunpack.c.h.b16 %v561
        %v896 = vunpack.c.l.b16 %v562
        %v897 = vunpack.c.h.b16 %v562
        %v898 = vunpack.c.l.b16 %v563
        %v899 = vunpack.c.h.b16 %v563
        %v900 = vunpack.c.l.b16 %v564
        %v901 = vunpack.c.h.b16 %v564
        %v902 = vunpack.c.l.b16 %v565
        %v903 = vunpack.c.h.b16 %v565
        %v904 = vunpack.c.l.b16 %v566
        %v905 = vunpack.c.h.b16 %v566
        %v906 = vunpack.c.l.b16 %v567
        %v907 = vunpack.c.h.b16 %v567
        %v908 = vunpack.c.l.b16 %v568
        %v909 = vunpack.c.h.b16 %v568
        %v910 = vunpack.c.l.b16 %v569
        %v911 = vunpack.c.h.b16 %v569
        %v912 = vunpack.c.l.b16 %v570
        %v913 = vunpack.c.h.b16 %v570
        %v914 = vunpack.c.l.b16 %v571
        %v915 = vunpack.c.h.b16 %v571
        %v916 = vunpack.c.l.b16 %v572
        %v917 = vunpack.c.h.b16 %v572
        %v918 = vunpack.c.l.b16 %v573
        %v919 = vunpack.c.h.b16 %v573
        %v920 = vunpack.c.l.b16 %v574
        %v921 = vunpack.c.h.b16 %v574
        %v922 = vunpack.c.l.b16 %v575
        %v923 = vunpack.c.h.b16 %v575
        %v924 = vunpack.c.l.b16 %v576
        %v925 = vunpack.c.h.b16 %v576
        %v926 = vunpack.c.l.b16 %v577
        %v927 = vunpack.c.h.b16 %v577
        %v928 = vunpack.c.l.b16 %v578
        %v929 = vunpack.c.h.b16 %v578
        %v930 = vunpack.c.l.b16 %v579
        %v931 = vunpack.c.h.b16 %v579
        %v932 = vunpack.c.l.b16 %v580
        %v933 = vunpack.c.h.b16 %v580
        %v934 = vunpack.c.l.b16 %v581
        %v935 = vunpack.c.h.b16 %v581
        %v936 = vunpack.c.l.b16 %v582
        %v937 = vunpack.c.h.b16 %v582
        %v938 = vunpack.c.l.b16 %v583
        %v939 = vunpack.c.h.b16 %v583
        %v940 = vunpack.c.l.b16 %v584
        %v941 = vunpack.c.h.b16 %v584
        %v942 = vunpack.c.l.b16 %v585
        %v943 = vunpack.c.h.b16 %v585
        %v944 = vunpack.c.l.b16 %v586
        %v945 = vunpack.c.h.b16 %v586
        %v946 = vunpack.c.l.b16 %v587
        %v947 = vunpack.c.h.b16 %v587
        %v948 = vunpack.c.l.b16 %v588
        %v949 = vunpack.c.h.b16 %v588
        %v950 = vunpack.c.l.b16 %v589
        %v951 = vunpack.c.h.b16 %v589
        %v952 = vunpack.c.l.b16 %v590
        %v953 = vunpack.c.h.b16 %v590
        %v954 = vunpack.c.l.b16 %v591
        %v955 = vunpack.c.h.b16 %v591
        %v956 = vunpack.c.l.b16 %v592
        %v957 = vunpack.c.h.b16 %v592
        %v958 = vunpack.c.l.b16 %v593
        %v959 = vunpack.c.h.b16 %v593
        %v960 = vunpack.c.l.b16 %v594
        %v961 = vunpack.c.h.b16 %v594
        %v962 = vunpack.c.l.b16 %v595
        %v963 = vunpack.c.h.b16 %v595
        %v964 = vunpack.c.l.b16 %v596
        %v965 = vunpack.c.h.b16 %v596
        %v966 = vunpack.c.l.b16 %v597
        %v967 = vunpack.c.h.b16 %v597
        %v968 = vunpack.c.l.b16 %v598
        %v969 = vunpack.c.h.b16 %v598
        %v970 = vunpack.c.l.b16 %v599
        %v971 = vunpack.c.h.b16 %v599
        %v972 = vunpack.c.l.b16 %v600
        %v973 = vunpack.c.h.b16 %v600
        %v974 = vunpack.c.l.b16 %v601
        %v975 = vunpack.c.h.b16 %v601
        %v976 = vunpack.c.l.b16 %v602
        %v977 = vunpack.c.h.b16 %v602
        %v978 = vunpack.c.l.b16 %v603
        %v979 = vunpack.c.h.b16 %v603
        %v980 = vunpack.c.l.b16 %v604
        %v981 = vunpack.c.h.b16 %v604
        %v982 = vunpack.c.l.b16 %v605
        %v983 = vunpack.c.h.b16 %v605
        %v984 = vunpack.c.l.b16 %v606
        %v985 = vunpack.c.h.b16 %v606
        %v986 = vunpack.c.l.b16 %v607
        %v987 = vunpack.c.h.b16 %v607
        %v988 = vunpack.c.l.b16 %v608
        %v989 = vunpack.c.h.b16 %v608
        %v990 = vunpack.c.l.b16 %v609
        %v991 = vunpack.c.h.b16 %v609
        %v992 = vunpack.c.l.b16 %v610
        %v993 = vunpack.c.h.b16 %v610
        %v994 = vunpack.c.l.b16 %v611
        %v995 = vunpack.c.h.b16 %v611
        %v996 = vunpack.c.l.b16 %v612
        %v997 = vunpack.c.h.b16 %v612
        %v998 = vunpack.c.l.b16 %v613
        %v999 = vunpack.c.h.b16 %v613
        %v1000 = vunpack.c.l.b16 %v614
        %v1001 = vunpack.c.h.b16 %v614
        %v1002 = vunpack.c.l.b16 %v615
        %v1003 = vunpack.c.h.b16 %v615
        %v1004 = vunpack.c.l.b16 %v616
        %v1005 = vunpack.c.h.b16 %v616
        %v1006 = vunpack.c.l.b16 %v617
        %v1007 = vunpack.c.h.b16 %v617
        %v1008 = vunpack.c.l.b16 %v618
        %v1009 = vunpack.c.h.b16 %v618
        %v1010 = vunpack.c.l.b16 %v619
        %v1011 = vunpack.c.h.b16 %v619
        %v1012 = vunpack.c.l.b16 %v620
        %v1013 = vunpack.c.h.b16 %v620
        %v1014 = vunpack.c.l.b16 %v621
        %v1015 = vunpack.c.h.b16 %v621
        %v1016 = vpack.c.b16 %v764, %v760
        %v1017 = vpack.c.b16 %v765, %v761
        %v1018 = vpack.c.b16 %v766, %v762
        %v1019 = vpack.c.b16 %v767, %v763
        %v1020 = vpack.c.b16 %v772, %v768
        %v1021 = vpack.c.b16 %v773, %v769
        %v1022 = vpack.c.b16 %v774, %v770
        %v1023 = vpack.c.b16 %v775, %v771
        %v1024 = vpack.c.b16 %v780, %v776
        %v1025 = vpack.c.b16 %v781, %v777
        %v1026 = vpack.c.b16 %v782, %v778
        %v1027 = vpack.c.b16 %v783, %v779
        %v1028 = vpack.c.b16 %v788, %v784
        %v1029 = vpack.c.b16 %v789, %v785
        %v1030 = vpack.c.b16 %v790, %v786
        %v1031 = vpack.c.b16 %v791, %v787
        %v1032 = vpack.c.b16 %v796, %v792
        %v1033 = vpack.c.b16 %v797, %v793
        %v1034 = vpack.c.b16 %v798, %v794
        %v1035 = vpack.c.b16 %v799, %v795
        %v1036 = vpack.c.b16 %v804, %v800
        %v1037 = vpack.c.b16 %v805, %v801
        %v1038 = vpack.c.b16 %v806, %v802
        %v1039 = vpack.c.b16 %v807, %v803
        %v1040 = vpack.c.b16 %v812, %v808
        %v1041 = vpack.c.b16 %v813, %v809
        %v1042 = vpack.c.b16 %v814, %v810
        %v1043 = vpack.c.b16 %v815, %v811
        %v1044 = vpack.c.b16 %v820, %v816
        %v1045 = vpack.c.b16 %v821, %v817
        %v1046 = vpack.c.b16 %v822, %v818
        %v1047 = vpack.c.b16 %v823, %v819
        %v1048 = vpack.c.b16 %v828, %v824
        %v1049 = vpack.c.b16 %v829, %v825
        %v1050 = vpack.c.b16 %v830, %v826
        %v1051 = vpack.c.b16 %v831, %v827
        %v1052 = vpack.c.b16 %v836, %v832
        %v1053 = vpack.c.b16 %v837, %v833
        %v1054 = vpack.c.b16 %v838, %v834
        %v1055 = vpack.c.b16 %v839, %v835
        %v1056 = vpack.c.b16 %v844, %v840
        %v1057 = vpack.c.b16 %v845, %v841
        %v1058 = vpack.c.b16 %v846, %v842
        %v1059 = vpack.c.b16 %v847, %v843
        %v1060 = vpack.c.b16 %v852, %v848
        %v1061 = vpack.c.b16 %v853, %v849
        %v1062 = vpack.c.b16 %v854, %v850
        %v1063 = vpack.c.b16 %v855, %v851
        %v1064 = vpack.c.b16 %v860, %v856
        %v1065 = vpack.c.b16 %v861, %v857
        %v1066 = vpack.c.b16 %v862, %v858
        %v1067 = vpack.c.b16 %v863, %v859
        %v1068 = vpack.c.b16 %v868, %v864
        %v1069 = vpack.c.b16 %v869, %v865
        %v1070 = vpack.c.b16 %v870, %v866
        %v1071 = vpack.c.b16 %v871, %v867
        %v1072 = vpack.c.b16 %v876, %v872
        %v1073 = vpack.c.b16 %v877, %v873
        %v1074 = vpack.c.b16 %v878, %v874
        %v1075 = vpack.c.b16 %v879, %v875
        %v1076 = vpack.c.b16 %v884, %v880
        %v1077 = vpack.c.b16 %v885, %v881
        %v1078 = vpack.c.b16 %v886, %v882
        %v1079 = vpack.c.b16 %v887, %v883
        %v1080 = vpack.c.b16 %v892, %v888
        %v1081 = vpack.c.b16 %v893, %v889
        %v1082 = vpack.c.b16 %v894, %v890
        %v1083 = vpack.c.b16 %v895, %v891
        %v1084 = vpack.c.b16 %v900, %v896
        %v1085 = vpack.c.b16 %v901, %v897
        %v1086 = vpack.c.b16 %v902, %v898
        %v1087 = vpack.c.b16 %v903, %v899
        %v1088 = vpack.c.b16 %v908, %v904
        %v1089 = vpack.c.b16 %v909, %v905
        %v1090 = vpack.c.b16 %v910, %v906
        %v1091 = vpack.c.b16 %v911, %v907
        %v1092 = vpack.c.b16 %v916, %v912
        %v1093 = vpack.c.b16 %v917, %v913
        %v1094 = vpack.c.b16 %v918, %v914
        %v1095 = vpack.c.b16 %v919, %v915
        %v1096 = vpack.c.b16 %v924, %v920
        %v1097 = vpack.c.b16 %v925, %v921
        %v1098 = vpack.c.b16 %v926, %v922
        %v1099 = vpack.c.b16 %v927, %v923
        %v1100 = vpack.c.b16 %v932, %v928
        %v1101 = vpack.c.b16 %v933, %v929
        %v1102 = vpack.c.b16 %v934, %v930
        %v1103 = vpack.c.b16 %v935, %v931
        %v1104 = vpack.c.b16 %v940, %v936
        %v1105 = vpack.c.b16 %v941, %v937
        %v1106 = vpack.c.b16 %v942, %v938
        %v1107 = vpack.c.b16 %v943, %v939
        %v1108 = vpack.c.b16 %v948, %v944
        %v1109 = vpack.c.b16 %v949, %v945
        %v1110 = vpack.c.b16 %v950, %v946
        %v1111 = vpack.c.b16 %v951, %v947
        %v1112 = vpack.c.b16 %v956, %v952
        %v1113 = vpack.c.b16 %v957, %v953
        %v1114 = vpack.c.b16 %v958, %v954
        %v1115 = vpack.c.b16 %v959, %v955
        %v1116 = vpack.c.b16 %v964, %v960
        %v1117 = vpack.c.b16 %v965, %v961
        %v1118 = vpack.c.b16 %v966, %v962
        %v1119 = vpack.c.b16 %v967, %v963
        %v1120 = vpack.c.b16 %v972, %v968
        %v1121 = vpack.c.b16 %v973, %v969
        %v1122 = vpack.c.b16 %v974, %v970
        %v1123 = vpack.c.b16 %v975, %v971
        %v1124 = vpack.c.b16 %v980, %v976
        %v1125 = vpack.c.b16 %v981, %v977
        %v1126 = vpack.c.b16 %v982, %v978
        %v1127 = vpack.c.b16 %v983, %v979
        %v1128 = vpack.c.b16 %v988, %v984
        %v1129 = vpack.c.b16 %v989, %v985
        %v1130 = vpack.c.b16 %v990, %v986
        %v1131 = vpack.c.b16 %v991, %v987
        %v1132 = vpack.c.b16 %v996, %v992
        %v1133 = vpack.c.b16 %v997, %v993
        %v1134 = vpack.c.b16 %v998, %v994
        %v1135 = vpack.c.b16 %v999, %v995
        %v1136 = vpack.c.b16 %v1004, %v1000
        %v1137 = vpack.c.b16 %v1005, %v1001
        %v1138 = vpack.c.b16 %v1006, %v1002
        %v1139 = vpack.c.b16 %v1007, %v1003
        %v1140 = vpack.c.b16 %v1012, %v1008
        %v1141 = vpack.c.b16 %v1013, %v1009
        %v1142 = vpack.c.b16 %v1014, %v1010
        %v1143 = vpack.c.b16 %v1015, %v1011
        %1272 = vmatpush.bf16.msra.mxu0 %v1044
        %1273 = vmatpush.bf16.msra.mxu0 %v1040
        %1274 = vmatpush.bf16.msra.mxu0 %v1036
        %1275 = vmatpush.bf16.msra.mxu0 %v1032
        %1276 = vmatpush.bf16.msra.mxu0 %v1028
        %1277 = vmatpush.bf16.msra.mxu0 %v1024
        %1278 = vmatpush.bf16.msra.mxu0 %v1020
        %1279 = vmatpush.bf16.msra.mxu0 %v1016
        %1280 = vmatmul.bf16.gmra.mxu0 %v490
        %v1281 = vpop.f32.mrf.mxu0
        %v1282 = vadd.f32 %v624, %v1281
        %v1283 = vpop.f32.mrf.mxu0
        %1284 = vdwg.mxu0
        %1285 = vmatpush.bf16.msra.mxu0 %v1076
        %1286 = vmatpush.bf16.msra.mxu0 %v1072
        %1287 = vmatpush.bf16.msra.mxu0 %v1068
        %1288 = vmatpush.bf16.msra.mxu0 %v1064
        %1289 = vmatpush.bf16.msra.mxu0 %v1060
        %1290 = vmatpush.bf16.msra.mxu0 %v1056
        %1291 = vmatpush.bf16.msra.mxu0 %v1052
        %1292 = vmatpush.bf16.msra.mxu0 %v1048
        %1293 = vmatmul.bf16.gmra.mxu0 %v491
        %v1294 = vpop.f32.mrf.mxu0
        %v1295 = vadd.f32 %v1282, %v1294
        %v1296 = vpop.f32.mrf.mxu0
        %1297 = vdwg.mxu0
        %1298 = vmatpush.bf16.msra.mxu0 %v1108
        %1299 = vmatpush.bf16.msra.mxu0 %v1104
        %1300 = vmatpush.bf16.msra.mxu0 %v1100
        %1301 = vmatpush.bf16.msra.mxu0 %v1096
        %1302 = vmatpush.bf16.msra.mxu0 %v1092
        %1303 = vmatpush.bf16.msra.mxu0 %v1088
        %1304 = vmatpush.bf16.msra.mxu0 %v1084
        %1305 = vmatpush.bf16.msra.mxu0 %v1080
        %1306 = vmatmul.bf16.gmra.mxu0 %v492
        %v1307 = vpop.f32.mrf.mxu0
        %v1308 = vadd.f32 %v1295, %v1307
        %v1309 = vpop.f32.mrf.mxu0
        %1310 = vdwg.mxu0
        %1311 = vmatpush.bf16.msra.mxu0 %v1140
        %1312 = vmatpush.bf16.msra.mxu0 %v1136
        %1313 = vmatpush.bf16.msra.mxu0 %v1132
        %1314 = vmatpush.bf16.msra.mxu0 %v1128
        %1315 = vmatpush.bf16.msra.mxu0 %v1124
        %1316 = vmatpush.bf16.msra.mxu0 %v1120
        %1317 = vmatpush.bf16.msra.mxu0 %v1116
        %1318 = vmatpush.bf16.msra.mxu0 %v1112
        %1319 = vmatmul.bf16.gmra.mxu0 %v493
        %v1320 = vpop.f32.mrf.mxu0
        %v1321 = vadd.f32 %v1308, %v1320
        %v1322 = vpop.f32.mrf.mxu0
        %1323 = vdwg.mxu0
        %1324 = vmatpush.bf16.msra.mxu0 %v1045
        %1325 = vmatpush.bf16.msra.mxu0 %v1041
        %1326 = vmatpush.bf16.msra.mxu0 %v1037
        %1327 = vmatpush.bf16.msra.mxu0 %v1033
        %1328 = vmatpush.bf16.msra.mxu0 %v1029
        %1329 = vmatpush.bf16.msra.mxu0 %v1025
        %1330 = vmatpush.bf16.msra.mxu0 %v1021
        %1331 = vmatpush.bf16.msra.mxu0 %v1017
        %1332 = vmatmul.bf16.gmra.mxu0 %v490
        %v1333 = vpop.f32.mrf.mxu0
        %v1334 = vadd.f32 %v625, %v1333
        %v1335 = vpop.f32.mrf.mxu0
        %1336 = vdwg.mxu0
        %1337 = vmatpush.bf16.msra.mxu0 %v1077
        %1338 = vmatpush.bf16.msra.mxu0 %v1073
        %1339 = vmatpush.bf16.msra.mxu0 %v1069
        %1340 = vmatpush.bf16.msra.mxu0 %v1065
        %1341 = vmatpush.bf16.msra.mxu0 %v1061
        %1342 = vmatpush.bf16.msra.mxu0 %v1057
        %1343 = vmatpush.bf16.msra.mxu0 %v1053
        %1344 = vmatpush.bf16.msra.mxu0 %v1049
        %1345 = vmatmul.bf16.gmra.mxu0 %v491
        %v1346 = vpop.f32.mrf.mxu0
        %v1347 = vadd.f32 %v1334, %v1346
        %v1348 = vpop.f32.mrf.mxu0
        %1349 = vdwg.mxu0
        %1350 = vmatpush.bf16.msra.mxu0 %v1109
        %1351 = vmatpush.bf16.msra.mxu0 %v1105
        %1352 = vmatpush.bf16.msra.mxu0 %v1101
        %1353 = vmatpush.bf16.msra.mxu0 %v1097
        %1354 = vmatpush.bf16.msra.mxu0 %v1093
        %1355 = vmatpush.bf16.msra.mxu0 %v1089
        %1356 = vmatpush.bf16.msra.mxu0 %v1085
        %1357 = vmatpush.bf16.msra.mxu0 %v1081
        %1358 = vmatmul.bf16.gmra.mxu0 %v492
        %v1359 = vpop.f32.mrf.mxu0
        %v1360 = vadd.f32 %v1347, %v1359
        %v1361 = vpop.f32.mrf.mxu0
        %1362 = vdwg.mxu0
        %1363 = vmatpush.bf16.msra.mxu0 %v1141
        %1364 = vmatpush.bf16.msra.mxu0 %v1137
        %1365 = vmatpush.bf16.msra.mxu0 %v1133
        %1366 = vmatpush.bf16.msra.mxu0 %v1129
        %1367 = vmatpush.bf16.msra.mxu0 %v1125
        %1368 = vmatpush.bf16.msra.mxu0 %v1121
        %1369 = vmatpush.bf16.msra.mxu0 %v1117
        %1370 = vmatpush.bf16.msra.mxu0 %v1113
        %1371 = vmatmul.bf16.gmra.mxu0 %v493
        %v1372 = vpop.f32.mrf.mxu0
        %v1373 = vadd.f32 %v1360, %v1372
        %v1374 = vpop.f32.mrf.mxu0
        %1375 = vdwg.mxu0
        %1376 = vmatpush.bf16.msra.mxu0 %v1046
        %1377 = vmatpush.bf16.msra.mxu0 %v1042
        %1378 = vmatpush.bf16.msra.mxu0 %v1038
        %1379 = vmatpush.bf16.msra.mxu0 %v1034
        %1380 = vmatpush.bf16.msra.mxu0 %v1030
        %1381 = vmatpush.bf16.msra.mxu0 %v1026
        %1382 = vmatpush.bf16.msra.mxu0 %v1022
        %1383 = vmatpush.bf16.msra.mxu0 %v1018
        %1384 = vmatmul.bf16.gmra.mxu0 %v490
        %v1385 = vpop.f32.mrf.mxu0
        %v1386 = vadd.f32 %v626, %v1385
        %v1387 = vpop.f32.mrf.mxu0
        %1388 = vdwg.mxu0
        %1389 = vmatpush.bf16.msra.mxu0 %v1078
        %1390 = vmatpush.bf16.msra.mxu0 %v1074
        %1391 = vmatpush.bf16.msra.mxu0 %v1070
        %1392 = vmatpush.bf16.msra.mxu0 %v1066
        %1393 = vmatpush.bf16.msra.mxu0 %v1062
        %1394 = vmatpush.bf16.msra.mxu0 %v1058
        %1395 = vmatpush.bf16.msra.mxu0 %v1054
        %1396 = vmatpush.bf16.msra.mxu0 %v1050
        %1397 = vmatmul.bf16.gmra.mxu0 %v491
        %v1398 = vpop.f32.mrf.mxu0
        %v1399 = vadd.f32 %v1386, %v1398
        %v1400 = vpop.f32.mrf.mxu0
        %1401 = vdwg.mxu0
        %1402 = vmatpush.bf16.msra.mxu0 %v1110
        %1403 = vmatpush.bf16.msra.mxu0 %v1106
        %1404 = vmatpush.bf16.msra.mxu0 %v1102
        %1405 = vmatpush.bf16.msra.mxu0 %v1098
        %1406 = vmatpush.bf16.msra.mxu0 %v1094
        %1407 = vmatpush.bf16.msra.mxu0 %v1090
        %1408 = vmatpush.bf16.msra.mxu0 %v1086
        %1409 = vmatpush.bf16.msra.mxu0 %v1082
        %1410 = vmatmul.bf16.gmra.mxu0 %v492
        %v1411 = vpop.f32.mrf.mxu0
        %v1412 = vadd.f32 %v1399, %v1411
        %v1413 = vpop.f32.mrf.mxu0
        %1414 = vdwg.mxu0
        %1415 = vmatpush.bf16.msra.mxu0 %v1142
        %1416 = vmatpush.bf16.msra.mxu0 %v1138
        %1417 = vmatpush.bf16.msra.mxu0 %v1134
        %1418 = vmatpush.bf16.msra.mxu0 %v1130
        %1419 = vmatpush.bf16.msra.mxu0 %v1126
        %1420 = vmatpush.bf16.msra.mxu0 %v1122
        %1421 = vmatpush.bf16.msra.mxu0 %v1118
        %1422 = vmatpush.bf16.msra.mxu0 %v1114
        %1423 = vmatmul.bf16.gmra.mxu0 %v493
        %v1424 = vpop.f32.mrf.mxu0
        %v1425 = vadd.f32 %v1412, %v1424
        %v1426 = vpop.f32.mrf.mxu0
        %1427 = vdwg.mxu0
        %1428 = vmatpush.bf16.msra.mxu0 %v1047
        %1429 = vmatpush.bf16.msra.mxu0 %v1043
        %1430 = vmatpush.bf16.msra.mxu0 %v1039
        %1431 = vmatpush.bf16.msra.mxu0 %v1035
        %1432 = vmatpush.bf16.msra.mxu0 %v1031
        %1433 = vmatpush.bf16.msra.mxu0 %v1027
        %1434 = vmatpush.bf16.msra.mxu0 %v1023
        %1435 = vmatpush.bf16.msra.mxu0 %v1019
        %1436 = vmatmul.bf16.gmra.mxu0 %v490
        %v1437 = vpop.f32.mrf.mxu0
        %v1438 = vadd.f32 %v627, %v1437
        %v1439 = vpop.f32.mrf.mxu0
        %1440 = vdwg.mxu0
        %1441 = vmatpush.bf16.msra.mxu0 %v1079
        %1442 = vmatpush.bf16.msra.mxu0 %v1075
        %1443 = vmatpush.bf16.msra.mxu0 %v1071
        %1444 = vmatpush.bf16.msra.mxu0 %v1067
        %1445 = vmatpush.bf16.msra.mxu0 %v1063
        %1446 = vmatpush.bf16.msra.mxu0 %v1059
        %1447 = vmatpush.bf16.msra.mxu0 %v1055
        %1448 = vmatpush.bf16.msra.mxu0 %v1051
        %1449 = vmatmul.bf16.gmra.mxu0 %v491
        %v1450 = vpop.f32.mrf.mxu0
        %v1451 = vadd.f32 %v1438, %v1450
        %v1452 = vpop.f32.mrf.mxu0
        %1453 = vdwg.mxu0
        %1454 = vmatpush.bf16.msra.mxu0 %v1111
        %1455 = vmatpush.bf16.msra.mxu0 %v1107
        %1456 = vmatpush.bf16.msra.mxu0 %v1103
        %1457 = vmatpush.bf16.msra.mxu0 %v1099
        %1458 = vmatpush.bf16.msra.mxu0 %v1095
        %1459 = vmatpush.bf16.msra.mxu0 %v1091
        %1460 = vmatpush.bf16.msra.mxu0 %v1087
        %1461 = vmatpush.bf16.msra.mxu0 %v1083
        %1462 = vmatmul.bf16.gmra.mxu0 %v492
        %v1463 = vpop.f32.mrf.mxu0
        %v1464 = vadd.f32 %v1451, %v1463
        %v1465 = vpop.f32.mrf.mxu0
        %1466 = vdwg.mxu0
        %1467 = vmatpush.bf16.msra.mxu0 %v1143
        %1468 = vmatpush.bf16.msra.mxu0 %v1139
        %1469 = vmatpush.bf16.msra.mxu0 %v1135
        %1470 = vmatpush.bf16.msra.mxu0 %v1131
        %1471 = vmatpush.bf16.msra.mxu0 %v1127
        %1472 = vmatpush.bf16.msra.mxu0 %v1123
        %1473 = vmatpush.bf16.msra.mxu0 %v1119
        %1474 = vmatpush.bf16.msra.mxu0 %v1115
        %1475 = vmatmul.bf16.gmra.mxu0 %v493
        %v1476 = vpop.f32.mrf.mxu0
        %v1477 = vadd.f32 %v1464, %v1476
        %v1478 = vpop.f32.mrf.mxu0
        %1479 = vdwg.mxu0
        %v1480 = vmax.f32 %v1321, 0.0
        %v1481 = vmax.f32 %v1373, 0.0
        %v1482 = vmax.f32 %v1425, 0.0
        %v1483 = vmax.f32 %v1477, 0.0
        %v1484 = vpack.c.bf16 %v1480, %v1480
        %v1485 = vpack.c.bf16 %v1481, %v1481
        %v1486 = vpack.c.bf16 %v1482, %v1482
        %v1487 = vpack.c.bf16 %v1483, %v1483
        %v1488 = vld [vmem:[#allocation11] sm:$0xf]
        %v1489 = vld [vmem:[#allocation11 + $0x4] sm:$0xf]
        %v1490 = vld [vmem:[#allocation11 + $0x8] sm:$0xf]
        %v1491 = vld [vmem:[#allocation11 + $0xc] sm:$0xf]
        %v1492 = vld [vmem:[#allocation11 + $0x10] sm:$0xf]
        %v1493 = vld [vmem:[#allocation11 + $0x14] sm:$0xf]
        %v1494 = vld [vmem:[#allocation11 + $0x18] sm:$0xf]
        %v1495 = vld [vmem:[#allocation11 + $0x1c] sm:$0xf]
        %v1496 = vld [vmem:[#allocation11 + $0x20] sm:$0xf]
        %v1497 = vld [vmem:[#allocation11 + $0x24] sm:$0xf]
        %v1498 = vld [vmem:[#allocation11 + $0x28] sm:$0xf]
        %v1499 = vld [vmem:[#allocation11 + $0x2c] sm:$0xf]
        %v1500 = vld [vmem:[#allocation11 + $0x30] sm:$0xf]
        %v1501 = vld [vmem:[#allocation11 + $0x34] sm:$0xf]
        %v1502 = vld [vmem:[#allocation11 + $0x38] sm:$0xf]
        %v1503 = vld [vmem:[#allocation11 + $0x3c] sm:$0xf]
        %v1504 = vld [vmem:[#allocation11 + $0x40] sm:$0xf]
        %v1505 = vld [vmem:[#allocation11 + $0x44] sm:$0xf]
        %v1506 = vld [vmem:[#allocation11 + $0x48] sm:$0xf]
        %v1507 = vld [vmem:[#allocation11 + $0x4c] sm:$0xf]
        %v1508 = vld [vmem:[#allocation11 + $0x50] sm:$0xf]
        %v1509 = vld [vmem:[#allocation11 + $0x54] sm:$0xf]
        %v1510 = vld [vmem:[#allocation11 + $0x58] sm:$0xf]
        %v1511 = vld [vmem:[#allocation11 + $0x5c] sm:$0xf]
        %v1512 = vld [vmem:[#allocation11 + $0x60] sm:$0xf]
        %v1513 = vld [vmem:[#allocation11 + $0x64] sm:$0xf]
        %v1514 = vld [vmem:[#allocation11 + $0x68] sm:$0xf]
        %v1515 = vld [vmem:[#allocation11 + $0x6c] sm:$0xf]
        %v1516 = vld [vmem:[#allocation11 + $0x70] sm:$0xf]
        %v1517 = vld [vmem:[#allocation11 + $0x74] sm:$0xf]
        %v1518 = vld [vmem:[#allocation11 + $0x78] sm:$0xf]
        %v1519 = vld [vmem:[#allocation11 + $0x7c] sm:$0xf]
        %v1520 = vld [vmem:[#allocation11 + $0x80] sm:$0xf]
        %v1521 = vld [vmem:[#allocation11 + $0x84] sm:$0xf]
        %v1522 = vld [vmem:[#allocation11 + $0x88] sm:$0xf]
        %v1523 = vld [vmem:[#allocation11 + $0x8c] sm:$0xf]
        %v1524 = vld [vmem:[#allocation11 + $0x90] sm:$0xf]
        %v1525 = vld [vmem:[#allocation11 + $0x94] sm:$0xf]
        %v1526 = vld [vmem:[#allocation11 + $0x98] sm:$0xf]
        %v1527 = vld [vmem:[#allocation11 + $0x9c] sm:$0xf]
        %v1528 = vld [vmem:[#allocation11 + $0xa0] sm:$0xf]
        %v1529 = vld [vmem:[#allocation11 + $0xa4] sm:$0xf]
        %v1530 = vld [vmem:[#allocation11 + $0xa8] sm:$0xf]
        %v1531 = vld [vmem:[#allocation11 + $0xac] sm:$0xf]
        %v1532 = vld [vmem:[#allocation11 + $0xb0] sm:$0xf]
        %v1533 = vld [vmem:[#allocation11 + $0xb4] sm:$0xf]
        %v1534 = vld [vmem:[#allocation11 + $0xb8] sm:$0xf]
        %v1535 = vld [vmem:[#allocation11 + $0xbc] sm:$0xf]
        %v1536 = vld [vmem:[#allocation11 + $0xc0] sm:$0xf]
        %v1537 = vld [vmem:[#allocation11 + $0xc4] sm:$0xf]
        %v1538 = vld [vmem:[#allocation11 + $0xc8] sm:$0xf]
        %v1539 = vld [vmem:[#allocation11 + $0xcc] sm:$0xf]
        %v1540 = vld [vmem:[#allocation11 + $0xd0] sm:$0xf]
        %v1541 = vld [vmem:[#allocation11 + $0xd4] sm:$0xf]
        %v1542 = vld [vmem:[#allocation11 + $0xd8] sm:$0xf]
        %v1543 = vld [vmem:[#allocation11 + $0xdc] sm:$0xf]
        %v1544 = vld [vmem:[#allocation11 + $0xe0] sm:$0xf]
        %v1545 = vld [vmem:[#allocation11 + $0xe4] sm:$0xf]
        %v1546 = vld [vmem:[#allocation11 + $0xe8] sm:$0xf]
        %v1547 = vld [vmem:[#allocation11 + $0xec] sm:$0xf]
        %v1548 = vld [vmem:[#allocation11 + $0xf0] sm:$0xf]
        %v1549 = vld [vmem:[#allocation11 + $0xf4] sm:$0xf]
        %v1550 = vld [vmem:[#allocation11 + $0xf8] sm:$0xf]
        %v1551 = vld [vmem:[#allocation11 + $0xfc] sm:$0xf]
        %v1552 = vld [vmem:[%s6] sm:$0x1]
        %v1554 = vperm.slane %v1552, 0
        %v1620 = vunpack.c.l.b16 %v1488
        %v1621 = vunpack.c.l.b16 %v1489
        %v1622 = vunpack.c.l.b16 %v1490
        %v1623 = vunpack.c.l.b16 %v1491
        %v1624 = vunpack.c.l.b16 %v1492
        %v1625 = vunpack.c.l.b16 %v1493
        %v1626 = vunpack.c.l.b16 %v1494
        %v1627 = vunpack.c.l.b16 %v1495
        %v1628 = vunpack.c.l.b16 %v1496
        %v1629 = vunpack.c.l.b16 %v1497
        %v1630 = vunpack.c.l.b16 %v1498
        %v1631 = vunpack.c.l.b16 %v1499
        %v1632 = vunpack.c.l.b16 %v1500
        %v1633 = vunpack.c.l.b16 %v1501
        %v1634 = vunpack.c.l.b16 %v1502
        %v1635 = vunpack.c.l.b16 %v1503
        %v1636 = vunpack.c.l.b16 %v1504
        %v1637 = vunpack.c.l.b16 %v1505
        %v1638 = vunpack.c.l.b16 %v1506
        %v1639 = vunpack.c.l.b16 %v1507
        %v1640 = vunpack.c.l.b16 %v1508
        %v1641 = vunpack.c.l.b16 %v1509
        %v1642 = vunpack.c.l.b16 %v1510
        %v1643 = vunpack.c.l.b16 %v1511
        %v1644 = vunpack.c.l.b16 %v1512
        %v1645 = vunpack.c.l.b16 %v1513
        %v1646 = vunpack.c.l.b16 %v1514
        %v1647 = vunpack.c.l.b16 %v1515
        %v1648 = vunpack.c.l.b16 %v1516
        %v1649 = vunpack.c.l.b16 %v1517
        %v1650 = vunpack.c.l.b16 %v1518
        %v1651 = vunpack.c.l.b16 %v1519
        %v1652 = vunpack.c.l.b16 %v1520
        %v1653 = vunpack.c.l.b16 %v1521
        %v1654 = vunpack.c.l.b16 %v1522
        %v1655 = vunpack.c.l.b16 %v1523
        %v1656 = vunpack.c.l.b16 %v1524
        %v1657 = vunpack.c.l.b16 %v1525
        %v1658 = vunpack.c.l.b16 %v1526
        %v1659 = vunpack.c.l.b16 %v1527
        %v1660 = vunpack.c.l.b16 %v1528
        %v1661 = vunpack.c.l.b16 %v1529
        %v1662 = vunpack.c.l.b16 %v1530
        %v1663 = vunpack.c.l.b16 %v1531
        %v1664 = vunpack.c.l.b16 %v1532
        %v1665 = vunpack.c.l.b16 %v1533
        %v1666 = vunpack.c.l.b16 %v1534
        %v1667 = vunpack.c.l.b16 %v1535
        %v1668 = vunpack.c.l.b16 %v1536
        %v1669 = vunpack.c.l.b16 %v1537
        %v1670 = vunpack.c.l.b16 %v1538
        %v1671 = vunpack.c.l.b16 %v1539
        %v1672 = vunpack.c.l.b16 %v1540
        %v1673 = vunpack.c.l.b16 %v1541
        %v1674 = vunpack.c.l.b16 %v1542
        %v1675 = vunpack.c.l.b16 %v1543
        %v1676 = vunpack.c.l.b16 %v1544
        %v1677 = vunpack.c.l.b16 %v1545
        %v1678 = vunpack.c.l.b16 %v1546
        %v1679 = vunpack.c.l.b16 %v1547
        %v1680 = vunpack.c.l.b16 %v1548
        %v1681 = vunpack.c.l.b16 %v1549
        %v1682 = vunpack.c.l.b16 %v1550
        %v1683 = vunpack.c.l.b16 %v1551
        %v1684 = vpack.c.b16 %v1621, %v1620
        %v1685 = vpack.c.b16 %v1623, %v1622
        %v1686 = vpack.c.b16 %v1625, %v1624
        %v1687 = vpack.c.b16 %v1627, %v1626
        %v1688 = vpack.c.b16 %v1629, %v1628
        %v1689 = vpack.c.b16 %v1631, %v1630
        %v1690 = vpack.c.b16 %v1633, %v1632
        %v1691 = vpack.c.b16 %v1635, %v1634
        %v1692 = vpack.c.b16 %v1637, %v1636
        %v1693 = vpack.c.b16 %v1639, %v1638
        %v1694 = vpack.c.b16 %v1641, %v1640
        %v1695 = vpack.c.b16 %v1643, %v1642
        %v1696 = vpack.c.b16 %v1645, %v1644
        %v1697 = vpack.c.b16 %v1647, %v1646
        %v1698 = vpack.c.b16 %v1649, %v1648
        %v1699 = vpack.c.b16 %v1651, %v1650
        %v1700 = vpack.c.b16 %v1653, %v1652
        %v1701 = vpack.c.b16 %v1655, %v1654
        %v1702 = vpack.c.b16 %v1657, %v1656
        %v1703 = vpack.c.b16 %v1659, %v1658
        %v1704 = vpack.c.b16 %v1661, %v1660
        %v1705 = vpack.c.b16 %v1663, %v1662
        %v1706 = vpack.c.b16 %v1665, %v1664
        %v1707 = vpack.c.b16 %v1667, %v1666
        %v1708 = vpack.c.b16 %v1669, %v1668
        %v1709 = vpack.c.b16 %v1671, %v1670
        %v1710 = vpack.c.b16 %v1673, %v1672
        %v1711 = vpack.c.b16 %v1675, %v1674
        %v1712 = vpack.c.b16 %v1677, %v1676
        %v1713 = vpack.c.b16 %v1679, %v1678
        %v1714 = vpack.c.b16 %v1681, %v1680
        %v1715 = vpack.c.b16 %v1683, %v1682
        %1748 = vmatpush.bf16.msra.mxu0 %v1691
        %1749 = vmatpush.bf16.msra.mxu0 %v1690
        %1750 = vmatpush.bf16.msra.mxu0 %v1689
        %1751 = vmatpush.bf16.msra.mxu0 %v1688
        %1752 = vmatpush.bf16.msra.mxu0 %v1687
        %1753 = vmatpush.bf16.msra.mxu0 %v1686
        %1754 = vmatpush.bf16.msra.mxu0 %v1685
        %1755 = vmatpush.bf16.msra.mxu0 %v1684
        %1756 = vmatmul.bf16.gmra.mxu0 %v1484
        %v1757 = vpop.f32.mrf.mxu0
        %v1758 = vadd.f32 %v1554, %v1757
        %v1759 = vpop.f32.mrf.mxu0
        %1760 = vdwg.mxu0
        %1761 = vmatpush.bf16.msra.mxu0 %v1699
        %1762 = vmatpush.bf16.msra.mxu0 %v1698
        %1763 = vmatpush.bf16.msra.mxu0 %v1697
        %1764 = vmatpush.bf16.msra.mxu0 %v1696
        %1765 = vmatpush.bf16.msra.mxu0 %v1695
        %1766 = vmatpush.bf16.msra.mxu0 %v1694
        %1767 = vmatpush.bf16.msra.mxu0 %v1693
        %1768 = vmatpush.bf16.msra.mxu0 %v1692
        %1769 = vmatmul.bf16.gmra.mxu0 %v1485
        %v1770 = vpop.f32.mrf.mxu0
        %v1771 = vadd.f32 %v1758, %v1770
        %v1772 = vpop.f32.mrf.mxu0
        %1773 = vdwg.mxu0
        %1774 = vmatpush.bf16.msra.mxu0 %v1707
        %1775 = vmatpush.bf16.msra.mxu0 %v1706
        %1776 = vmatpush.bf16.msra.mxu0 %v1705
        %1777 = vmatpush.bf16.msra.mxu0 %v1704
        %1778 = vmatpush.bf16.msra.mxu0 %v1703
        %1779 = vmatpush.bf16.msra.mxu0 %v1702
        %1780 = vmatpush.bf16.msra.mxu0 %v1701
        %1781 = vmatpush.bf16.msra.mxu0 %v1700
        %1782 = vmatmul.bf16.gmra.mxu0 %v1486
        %v1783 = vpop.f32.mrf.mxu0
        %v1784 = vadd.f32 %v1771, %v1783
        %v1785 = vpop.f32.mrf.mxu0
        %1786 = vdwg.mxu0
        %1787 = vmatpush.bf16.msra.mxu0 %v1715
        %1788 = vmatpush.bf16.msra.mxu0 %v1714
        %1789 = vmatpush.bf16.msra.mxu0 %v1713
        %1790 = vmatpush.bf16.msra.mxu0 %v1712
        %1791 = vmatpush.bf16.msra.mxu0 %v1711
        %1792 = vmatpush.bf16.msra.mxu0 %v1710
        %1793 = vmatpush.bf16.msra.mxu0 %v1709
        %1794 = vmatpush.bf16.msra.mxu0 %v1708
        %1795 = vmatmul.bf16.gmra.mxu0 %v1487
        %v1796 = vpop.f32.mrf.mxu0
        %v1797 = vadd.f32 %v1784, %v1796
        %v1798 = vpop.f32.mrf.mxu0
        %1799 = vdwg.mxu0
        %1801 = vrot.lane.b32.xlu0 %v1797, 96
        %v1802 = vpop.permute.xlu0 %1801
        %v1804 = vmax.f32 %v1797, %v1802
        %1806 = vrot.lane.b32.xlu0 %v1804, 64
        %v1807 = vpop.permute.xlu0 %1806
        %v1809 = vmax.f32 %v1804, %v1807
        %v1810 = vsub.f32 %v1797, %v1809
        %v1811 = vmul.f32 %v1810, 1.442695
        %v1812 = vpow.pop %v1811
        %1814 = vrot.lane.b32.xlu0 %v1809, 32
        %v1815 = vpop.permute.xlu0 %1814
        %v1817 = vsub.f32 %v1797, %v1815
        %v1818 = vmul.f32 %v1817, 1.442695
        %v1819 = vpow.pop %v1818
        %1821 = vrot.lane.b32.xlu0 %v1819, 96
        %v1822 = vpop.permute.xlu0 %1821
        %v1824 = vadd.f32 %v1812, %v1822
        %1825 = vrot.lane.b32.xlu0 %v1809, 64
        %v1826 = vpop.permute.xlu0 %1825
        %v1828 = vsub.f32 %v1797, %v1826
        %v1829 = vmul.f32 %v1828, 1.442695
        %v1830 = vpow.pop %v1829
        %1832 = vrot.lane.b32.xlu0 %v1830, 64
        %v1833 = vpop.permute.xlu0 %1832
        %v1835 = vadd.f32 %v1824, %v1833
        %1836 = vrot.lane.b32.xlu0 %v1809, 96
        %v1837 = vpop.permute.xlu0 %1836
        %v1839 = vsub.f32 %v1797, %v1837
        %v1840 = vmul.f32 %v1839, 1.442695
        %v1841 = vpow.pop %v1840
        %1843 = vrot.lane.b32.xlu0 %v1841, 32
        %v1844 = vpop.permute.xlu0 %1843
        %v1846 = vadd.f32 %v1835, %v1844
        %v1847 = vlog2.pop %v1846
        %v1848 = vmul.f32 %v1847, 0.6931472
        %v1849 = vadd.f32 %v1809, %v1848
        %1851 = vrot.lane.b32.xlu0 %v1849, 32
        %v1852 = vpop.permute.xlu0 %1851
        %1854 = vrot.lane.b32.xlu0 %v1849, 64
        %v1855 = vpop.permute.xlu0 %1854
        %1857 = vrot.lane.b32.xlu0 %v1849, 96
        %v1858 = vpop.permute.xlu0 %1857
        %v1860 = vsel %vm402, %v1849, %v1852
        %vm1861 = vcmask 523264
        %v1862 = vsel %vm1861, %v1860, %v1855
        %vm1863 = vcmask 785408
        %v1864 = vsel %vm1863, %v1862, %v1858
        %v1865 = vsub.f32 %v1797, %v1864
        %1866 = vst [vmem:[%s374] sm:$0xff] %v1865
        %s1867 = sand.u32 %s187, 1
        %s1868 = scalar_lea.sflag [#allocation4], %s1867
        %s1869 = sand.u32 %s187, 1
        %s1870 = smul.addr %s1869, 8
        %s1871 = scalar_lea.vmem [#allocation13], %s1870
        // Predicated region
        $region73: #{tpu_custom_call.1} parent=47 // pred_check
          %p1872 = pneg %p197
        $region74: #{tpu_custom_call.1} parent=47 // pred_check_branch
          %1874 = sbr.rel (%p1872) target = $region76
        $region75: #{tpu_custom_call.1} parent=47 // pred_region
          %1876 = vsyncadd %s1868, 0
          %s1877 = smul.addr %s27, 8
          %s1878 = scalar_lea.hbm %s7, %s1877
          %s1880 = sshll.u32 %s1871, 4
          %s1881 = int_to_ptr.vmem [resolvable:$true] %s1880
          %s1882 = sshll.u32 %s1878, 4
          %s1883 = int_to_ptr.hbm [resolvable:$true] %s1882
          %1885 = dma.vmem_to_hbm [thread:$0]  %s1881, 128, %s1883, %s1868
        $region76: #{tpu_custom_call.1} parent=47 // pred_fallthru
          _
      $region48: #{tpu_custom_call.1} parent=5 // pred_fallthru
        _
      %p1886 = scmp.le.s32.totalorder 2, %s22
      // Predicated region
      $region77: #{tpu_custom_call.1} parent=5 // pred_check
        %p1887 = pneg %p1886
      $region78: #{tpu_custom_call.1} parent=5 // pred_check_branch
        %1889 = sbr.rel (%p1887) target = $region80
      $region79: #{tpu_custom_call.1} parent=5 // pred_region
        %s1890 = ssub.s32 %s22, 2
        // Predicated region
        $region81: #{tpu_custom_call.1} parent=79 // pred_check
          %p1891 = pneg %p203
        $region82: #{tpu_custom_call.1} parent=79 // pred_check_branch
          %1893 = sbr.rel (%p1891) target = $region84
        $region83: #{tpu_custom_call.1} parent=79 // pred_region
          %s1894 = sand.u32 %s188, 1
          %s1895 = scalar_lea.sflag [#allocation4], %s1894
          %s1896 = sand.u32 %s188, 1
          %s1897 = smul.addr %s1896, 8
          %s1898 = scalar_lea.vmem [#allocation13], %s1897
          %1900 = dma.done %s1895, 128
        $region84: #{tpu_custom_call.1} parent=79 // pred_fallthru
          _
      $region80: #{tpu_custom_call.1} parent=5 // pred_fallthru
        _
    $region6: #{tpu_custom_call.1} parent=1 // loop_footer
      %s26 = sadd.s32 1, %s22
    $region7: #{tpu_custom_call.1} parent=1 // loop_footer_branch
      %21 = sbr.rel target = $region3
    $region8: #{tpu_custom_call.1} parent=1 // loop_exit
      _
    %1901 = vsyncpa [#allocation3], 1
    %s1902 = scalar_lea.sflag [#allocation3], 1
    %1903 = vsyncpa %s1902, 1
    %1904 = vsyncpa [#allocation6], 1
    %1905 = vsyncpa [#allocation9], 1
    %1906 = vsyncpa [#allocation12], 1
    %1907 = vsyncpa [#allocation4], 1
    %s1908 = scalar_lea.sflag [#allocation4], 1
    %1909 = vsyncpa %s1908, 1

</llo_original>
